<compile_context>
chip_gen: v5e
topology: v5e:2x2
jax: 0.10.0
libtpu: 0.0.40
codegen_flags: <defaults>
</compile_context>

<pallas_src>
import functools

import jax
import jax.numpy as jnp
from jax.experimental import pallas as pl
from jax.experimental.pallas import tpu as pltpu


def _elu(x):
    # Same formula used in-kernel and in the pure-JAX reference.
    return jnp.where(x > 0, x, jnp.exp(x) - 1.0)


# ----------------------------- fused Pallas kernel ---------------------------
def _gat_fused_kernel(*refs, cfgs, negative_slope, return_e):
    """Entire GAT forward pass (all layers) in one kernel, fully VMEM-resident.

    refs layout:
      inputs : x, adj(bf16), then one fused weight per layer
      outputs: logits (N, pad128), then per layer e (H, N, N) if return_e
    cfgs: static tuple of (H, D, residual, inner_activation) per layer.
    """
    L = len(cfgs)
    x_ref, adj_ref = refs[0], refs[1]
    w_refs = refs[2:2 + L]
    logits_ref = refs[2 + L]
    e_refs = refs[3 + L:] if return_e else []

    # Hoisted once for all layers / heads (adj shipped bf16; 0/1 exact).
    adj = adj_ref[...].astype(jnp.float32)                    # (N, N)
    adj_bias = (adj - 1.0) * jnp.float32(1e30)                # 0 on-edge, -1e30 off-edge
    h = x_ref[...]                                            # (N, F0), f32
    N = h.shape[0]

    for l, (H, D, residual, inner_act) in enumerate(cfgs):
        HD = H * D

        # One wide MXU pass: projection, (optional) linear residual, and the folded
        # attention scores el/er all share the same LHS and K.
        fw = jnp.dot(h, w_refs[l][...], preferred_element_type=jnp.float32)
        feat = fw[:, :HD]                                     # (N, H*D)
        off = HD
        if residual == "linear":
            res = fw[:, HD:2 * HD]                            # (N, H*D)
            off = 2 * HD
        elif residual == "identity":
            res = h                                           # Fin == H*D (checked in wrapper)
        else:
            res = None
        el_all = fw[:, off:off + H]                           # (N, H)  source-side scores
        er_all = fw[:, off + H:off + 2 * H]                   # (N, H)  dest-side scores

        # Single tiny sublane->lane transpose per layer (padded to 8 columns).
        if H % 8 != 0:
            el_pad = jnp.concatenate(
                [el_all, jnp.zeros((N, 8 - H % 8), jnp.float32)], axis=-1)
        else:
            el_pad = el_all
        el_rows = jnp.transpose(el_pad)                       # (>=8, N)

        # Pass 1: per-head edge logits + adjacency-masked softmax (VPU/EUP work),
        # storing e directly per head (contiguous first-axis slab store).
        alphas = []
        for hh in range(H):
            # e[v, u] = leaky_relu(el[u] + er[v])
            logits = er_all[:, hh:hh + 1] + el_rows[hh:hh + 1, :]      # (N_dst, N_src)
            logits = jnp.where(logits >= 0, logits, negative_slope * logits)
            if return_e:
                e_refs[l][hh] = logits * adj                  # dense edge logits, 0 off-edge

            masked = logits + adj_bias                        # single add (mask hoisted)
            m = jnp.max(masked, axis=-1, keepdims=True)
            p = jnp.exp(masked - m)                           # off-edge underflows to 0
            denom = jnp.sum(p, axis=-1, keepdims=True)        # >= 1 (self-loops asserted)
            inv = pl.reciprocal(denom, approx=True)           # EUP vrcp (free slot)
            inv = inv * (2.0 - denom * inv)                   # one Newton step -> ~f32 acc.
            alphas.append(p * inv)

        # Pass 2: back-to-back MXU aggregation matmuls (alpha @ feat_h) + residual.
        out_heads = []
        for hh in range(H):
            out_h = jnp.dot(alphas[hh], feat[:, hh * D:(hh + 1) * D],
                            preferred_element_type=jnp.float32)
            if res is not None:
                out_h = out_h + res[:, hh * D:(hh + 1) * D]
            out_heads.append(out_h)

        if l < L - 1:
            rst = out_heads[0] if H == 1 else jnp.concatenate(out_heads, axis=-1)
            if inner_act:                                     # activation inside GATConv
                rst = _elu(rst)
            h = _elu(rst)                                     # activation in GAT.forward
        else:
            # final layer: logits.mean(1) over heads; lane-pad and do ONE dense store.
            acc = out_heads[0]
            for hh in range(1, H):
                acc = acc + out_heads[hh]
            acc = acc * jnp.float32(1.0 / H)                  # (N, D_last)
            pad = logits_ref.shape[-1] - acc.shape[-1]
            if pad:
                acc = jnp.concatenate([acc, jnp.zeros((N, pad), jnp.float32)], axis=-1)
            logits_ref[...] = acc


# ------------------------------- forward wrapper -----------------------------
def gat_forward(adj, x, layers, *, negative_slope=0.2, return_e=True):
    """Mirrors GAT.forward for the whole stack with ONE fused pallas_call."""
    N, f_in = x.shape
    x = x.astype(jnp.float32)
    adj = adj.astype(jnp.float32)

    # All-masked destination rows would produce garbage alphas; require self-loops
    # up front instead of silently clamping the softmax denominator.
    assert bool(jnp.all(jnp.diagonal(adj) > 0)), "adjacency must contain self-loops"
    adj_bf16 = adj.astype(jnp.bfloat16)                       # 0/1 exact; halves N^2 DMA

    inputs = [x, adj_bf16]
    cfgs = []
    for p in layers:
        H, D = p["attn_l"].shape
        residual = p["residual"]
        if residual == "identity":
            assert f_in == H * D, "identity residual requires Fin == H*D"
        w = p["w"].astype(jnp.float32)
        # Fold the attention-score reductions into the projection matmul.
        w3 = w.reshape(f_in, H, D)
        wl = jnp.sum(w3 * p["attn_l"][None], axis=-1)         # (Fin, H)
        wr = jnp.sum(w3 * p["attn_r"][None], axis=-1)         # (Fin, H)
        cols = [w]
        if residual == "linear":
            cols.append(p["w_res"].astype(jnp.float32))       # fused residual projection
        cols += [wl, wr]
        inputs.append(jnp.concatenate(cols, axis=1))
        cfgs.append((H, D, residual, bool(p["inner_activation"])))
        f_in = H * D

    H_last, D_last = layers[-1]["attn_l"].shape
    pad_cols = ((D_last + 127) // 128) * 128                  # lane-dense logits store
    out_shapes = [jax.ShapeDtypeStruct((N, pad_cols), jnp.float32)]
    if return_e:
        for p in layers:
            H, _ = p["attn_l"].shape
            out_shapes.append(jax.ShapeDtypeStruct((H, N, N), jnp.float32))

    kernel = functools.partial(_gat_fused_kernel, cfgs=tuple(cfgs),
                               negative_slope=negative_slope, return_e=return_e)
    vmem = pl.BlockSpec(memory_space=pltpu.MemorySpace.VMEM)

    outs = pl.pallas_call(
        kernel,
        out_shape=tuple(out_shapes),
        in_specs=[vmem] * len(inputs),
        out_specs=tuple([vmem] * len(out_shapes)),
        compiler_params=pltpu.CompilerParams(vmem_limit_bytes=32 * 1024 * 1024),
    )(*inputs)

    logits = outs[0][:, :D_last]
    e_list = list(outs[1:]) if return_e else []
    return logits, e_list


# -------------------------- pure-JAX reference ------------------------------
def _gat_conv_ref(x, adj, p, negative_slope=0.2):
    H, D = p["attn_l"].shape
    N = x.shape[0]
    feat = (x @ p["w"]).reshape(N, H, D)
    el = jnp.sum(feat * p["attn_l"][None], axis=-1)          # (N, H) src
    er = jnp.sum(feat * p["attn_r"][None], axis=-1)          # (N, H) dst
    logits = er[:, None, :] + el[None, :, :]                 # (Ndst, Nsrc, H)
    logits = jnp.where(logits >= 0, logits, negative_slope * logits)
    e = jnp.transpose(logits, (2, 0, 1)) * adj[None]         # (H, Ndst, Nsrc)
    mask = adj[..., None]
    masked = jnp.where(mask > 0, logits, -1e30)
    m = jnp.max(masked, axis=1, keepdims=True)
    pr = jnp.exp(masked - m) * mask
    alpha = pr / jnp.sum(pr, axis=1, keepdims=True)
    rst = jnp.einsum("vuh,uhd->vhd", alpha, feat)
    if p["residual"] == "identity":
        rst = rst + x.reshape(N, H, D)
    elif p["residual"] == "linear":
        rst = rst + (x @ p["w_res"]).reshape(N, H, D)
    return rst.reshape(N, H * D), e


def _gat_forward_ref(adj, inputs, layers):
    h = inputs
    N = h.shape[0]
    e_list = []
    for p in layers[:-1]:
        out, e = _gat_conv_ref(h, adj, p)
        rst = out
        if p["inner_activation"]:
            rst = _elu(rst)
        h = _elu(rst)
        e_list.append(e)
    p = layers[-1]
    out, e = _gat_conv_ref(h, adj, p)
    H, D = p["attn_l"].shape
    e_list.append(e)
    return out.reshape(N, H, D).mean(axis=1), e_list


# ----------------------------- param init -----------------------------------
def init_layer(key, fin, H, D, residual, inner_activation):
    k1, k2, k3, k4 = jax.random.split(key, 4)
    gain = jnp.sqrt(2.0)
    p = {
        "w": (jax.random.normal(k1, (fin, H * D), jnp.float32) * gain
              / jnp.sqrt(jnp.float32(fin))),
        "attn_l": (jax.random.normal(k2, (H, D), jnp.float32) * gain
                   / jnp.sqrt(jnp.float32(D))),
        "attn_r": (jax.random.normal(k3, (H, D), jnp.float32) * gain
                   / jnp.sqrt(jnp.float32(D))),
        "residual": residual,
        "inner_activation": inner_activation,
    }
    if residual == "linear":
        p["w_res"] = (jax.random.normal(k4, (fin, H * D), jnp.float32)
                      / jnp.sqrt(jnp.float32(fin)))
    return p


# --------------------------------- main --------------------------------------
if __name__ == "__main__":
    key = jax.random.PRNGKey(0)
    N, d_data, num_hidden, n_cls = 64, 48, 32, 4
    heads = [2, 2, 1]          # 2 hidden GAT layers + 1 output layer

    k_x, k_adj, k0, k1, k2 = jax.random.split(key, 5)
    x = jax.random.normal(k_x, (N, d_data), jnp.float32)
    adj = (jax.random.uniform(k_adj, (N, N)) < 0.15).astype(jnp.float32)
    adj = jnp.maximum(adj, jnp.eye(N, dtype=jnp.float32))   # self-loops

    layers = [
        # GATConv(d_data -> num_hidden, heads[0], residual=False, activation=None)
        init_layer(k0, d_data, heads[0], num_hidden, "none", False),
        # GATConv(num_hidden*heads[0] -> num_hidden, heads[1], residual=True, activation=elu)
        init_layer(k1, num_hidden * heads[0], heads[1], num_hidden, "identity", True),
        # GATConv(num_hidden*heads[1] -> n_cls, heads[2], residual=True, activation=None)
        init_layer(k2, num_hidden * heads[1], heads[2], n_cls, "linear", False),
    ]

    logits, e_list = gat_forward(adj, x, layers)
    jax.block_until_ready(logits)
    for e in e_list:
        jax.block_until_ready(e)

    assert logits.shape == (N, n_cls)
    assert len(e_list) == 3
    assert e_list[0].shape == (heads[0], N, N)
    assert e_list[2].shape == (heads[2], N, N)

    # Numerical check against a pure-f32 dense JAX reference.  Tolerance leaves
    # margin for MXU multi-pass f32 rounding compounding across 3 layers.
    ref_logits, ref_e = _gat_forward_ref(adj, x, layers)
    assert jnp.allclose(logits, ref_logits, rtol=1e-2, atol=1e-2), "logits mismatch vs reference"
    for got, want in zip(e_list, ref_e):
        assert jnp.allclose(got, want, rtol=1e-2, atol=1e-2), "edge logits mismatch vs reference"

    print("KERNEL_OK")
</pallas_src>

<mosaic_0001>
module attributes {stable_mosaic.version = 11 : i64} {
  func.func @_gat_fused_kernel(%arg0: memref<64x48xf32, #tpu.memory_space<vmem>>, %arg1: memref<64x64xbf16, #tpu.memory_space<vmem>>, %arg2: memref<48x68xf32, #tpu.memory_space<vmem>>, %arg3: memref<64x68xf32, #tpu.memory_space<vmem>>, %arg4: memref<64x10xf32, #tpu.memory_space<vmem>>, %arg5: memref<64x128xf32, #tpu.memory_space<vmem>>, %arg6: memref<2x64x64xf32, #tpu.memory_space<vmem>>, %arg7: memref<2x64x64xf32, #tpu.memory_space<vmem>>, %arg8: memref<1x64x64xf32, #tpu.memory_space<vmem>>) attributes {dimension_semantics = [], scalar_prefetch = 0 : i64, scratch_operands = 0 : i64, tpu.core_type = #tpu.core_type<tc>} {
    %c0 = arith.constant 0 : index
    %c0_0 = arith.constant 0 : index
    %0 = vector.load %arg1[%c0, %c0_0] : memref<64x64xbf16, #tpu.memory_space<vmem>>, vector<64x64xbf16>
    %1 = arith.extf %0 : vector<64x64xbf16> to vector<64x64xf32>
    %cst = arith.constant 1.000000e+00 : f32
    %2 = vector.broadcast %cst : f32 to vector<64x64xf32>
    %3 = arith.subf %1, %2 : vector<64x64xf32>
    %cst_1 = arith.constant 1.000000e+30 : f32
    %4 = vector.broadcast %cst_1 : f32 to vector<64x64xf32>
    %5 = arith.mulf %3, %4 : vector<64x64xf32>
    %c0_2 = arith.constant 0 : index
    %c0_3 = arith.constant 0 : index
    %6 = vector.load %arg0[%c0_2, %c0_3] : memref<64x48xf32, #tpu.memory_space<vmem>>, vector<64x48xf32>
    %c0_4 = arith.constant 0 : index
    %c0_5 = arith.constant 0 : index
    %7 = vector.load %arg2[%c0_4, %c0_5] : memref<48x68xf32, #tpu.memory_space<vmem>>, vector<48x68xf32>
    %cst_6 = arith.constant dense<0.000000e+00> : vector<64x68xf32>
    %8 = tpu.matmul %6, %7, %cst_6 {dimension_numbers = #tpu.dot_dimension_numbers<[1], [0], [0], [1], [0, 0, 1, 1], [], []>} : vector<64x48xf32>, vector<48x68xf32>, vector<64x68xf32> -> vector<64x68xf32>
    %9 = vector.extract_strided_slice %8 {offsets = [0, 0], sizes = [64, 64], strides = [1, 1]} : vector<64x68xf32> to vector<64x64xf32>
    %10 = vector.extract_strided_slice %8 {offsets = [0, 64], sizes = [64, 2], strides = [1, 1]} : vector<64x68xf32> to vector<64x2xf32>
    %11 = vector.extract_strided_slice %8 {offsets = [0, 66], sizes = [64, 2], strides = [1, 1]} : vector<64x68xf32> to vector<64x2xf32>
    %cst_7 = arith.constant 0.000000e+00 : f32
    %12 = vector.broadcast %cst_7 : f32 to vector<64x6xf32>
    %13 = tpu.concatenate %10, %12 in 1 : vector<64x2xf32>, vector<64x6xf32> -> vector<64x8xf32>
    %14 = tpu.transpose %13, [1, 0] : vector<64x8xf32> -> vector<8x64xf32>
    %15 = vector.extract_strided_slice %11 {offsets = [0, 0], sizes = [64, 1], strides = [1, 1]} : vector<64x2xf32> to vector<64x1xf32>
    %16 = vector.extract_strided_slice %14 {offsets = [0, 0], sizes = [1, 64], strides = [1, 1]} : vector<8x64xf32> to vector<1x64xf32>
    %17 = vector.broadcast %15 : vector<64x1xf32> to vector<64x64xf32>
    %18 = vector.broadcast %16 : vector<1x64xf32> to vector<64x64xf32>
    %19 = arith.addf %17, %18 : vector<64x64xf32>
    %cst_8 = arith.constant 0.000000e+00 : f32
    %20 = vector.broadcast %cst_8 : f32 to vector<64x64xf32>
    %21 = arith.cmpf oge, %19, %20 : vector<64x64xf32>
    %cst_9 = arith.constant 2.000000e-01 : f32
    %22 = vector.broadcast %cst_9 : f32 to vector<64x64xf32>
    %23 = arith.mulf %22, %19 : vector<64x64xf32>
    %24 = arith.select %21, %19, %23 : vector<64x64xi1>, vector<64x64xf32>
    %25 = arith.mulf %24, %1 : vector<64x64xf32>
    %c0_10 = arith.constant 0 : index
    %c0_11 = arith.constant 0 : index
    %c0_12 = arith.constant 0 : index
    %26 = vector.load %arg6[%c0_10, %c0_11, %c0_12] : memref<2x64x64xf32, #tpu.memory_space<vmem>>, vector<1x64x64xf32>
    %27 = vector.shape_cast %26 : vector<1x64x64xf32> to vector<64x64xf32>
    %28 = vector.shape_cast %25 : vector<64x64xf32> to vector<1x64x64xf32>
    tpu.vector_store %arg6[%c0_10, %c0_11, %c0_12], %28 {strides = array<i32>} : memref<2x64x64xf32, #tpu.memory_space<vmem>>, vector<1x64x64xf32>,
    %29 = arith.addf %24, %5 : vector<64x64xf32>
    %cst_13 = arith.constant dense<0xFF800000> : vector<64xf32>
    %30 = vector.multi_reduction <maximumf>, %29, %cst_13 [1] : vector<64x64xf32> to vector<64xf32>
    %31 = vector.shape_cast %30 : vector<64xf32> to vector<64x1xf32>
    %32 = vector.broadcast %31 : vector<64x1xf32> to vector<64x64xf32>
    %33 = arith.subf %29, %32 : vector<64x64xf32>
    %34 = math.exp %33 : vector<64x64xf32>
    %cst_14 = arith.constant dense<0.000000e+00> : vector<64xf32>
    %35 = vector.multi_reduction <add>, %34, %cst_14 [1] : vector<64x64xf32> to vector<64xf32>
    %36 = vector.shape_cast %35 : vector<64xf32> to vector<64x1xf32>
    %37 = tpu.reciprocal %36 {approx = true} : vector<64x1xf32> -> vector<64x1xf32>
    %38 = arith.mulf %36, %37 : vector<64x1xf32>
    %cst_15 = arith.constant 2.000000e+00 : f32
    %39 = vector.broadcast %cst_15 : f32 to vector<64x1xf32>
    %40 = arith.subf %39, %38 : vector<64x1xf32>
    %41 = arith.mulf %37, %40 : vector<64x1xf32>
    %42 = vector.broadcast %41 : vector<64x1xf32> to vector<64x64xf32>
    %43 = arith.mulf %34, %42 : vector<64x64xf32>
    %44 = vector.extract_strided_slice %11 {offsets = [0, 1], sizes = [64, 1], strides = [1, 1]} : vector<64x2xf32> to vector<64x1xf32>
    %45 = vector.extract_strided_slice %14 {offsets = [1, 0], sizes = [1, 64], strides = [1, 1]} : vector<8x64xf32> to vector<1x64xf32>
    %46 = vector.broadcast %44 : vector<64x1xf32> to vector<64x64xf32>
    %47 = vector.broadcast %45 : vector<1x64xf32> to vector<64x64xf32>
    %48 = arith.addf %46, %47 : vector<64x64xf32>
    %cst_16 = arith.constant 0.000000e+00 : f32
    %49 = vector.broadcast %cst_16 : f32 to vector<64x64xf32>
    %50 = arith.cmpf oge, %48, %49 : vector<64x64xf32>
    %cst_17 = arith.constant 2.000000e-01 : f32
    %51 = vector.broadcast %cst_17 : f32 to vector<64x64xf32>
    %52 = arith.mulf %51, %48 : vector<64x64xf32>
    %53 = arith.select %50, %48, %52 : vector<64x64xi1>, vector<64x64xf32>
    %54 = arith.mulf %53, %1 : vector<64x64xf32>
    %c1 = arith.constant 1 : index
    %c0_18 = arith.constant 0 : index
    %c0_19 = arith.constant 0 : index
    %55 = vector.load %arg6[%c1, %c0_18, %c0_19] : memref<2x64x64xf32, #tpu.memory_space<vmem>>, vector<1x64x64xf32>
    %56 = vector.shape_cast %55 : vector<1x64x64xf32> to vector<64x64xf32>
    %57 = vector.shape_cast %54 : vector<64x64xf32> to vector<1x64x64xf32>
    tpu.vector_store %arg6[%c1, %c0_18, %c0_19], %57 {strides = array<i32>} : memref<2x64x64xf32, #tpu.memory_space<vmem>>, vector<1x64x64xf32>,
    %58 = arith.addf %53, %5 : vector<64x64xf32>
    %cst_20 = arith.constant dense<0xFF800000> : vector<64xf32>
    %59 = vector.multi_reduction <maximumf>, %58, %cst_20 [1] : vector<64x64xf32> to vector<64xf32>
    %60 = vector.shape_cast %59 : vector<64xf32> to vector<64x1xf32>
    %61 = vector.broadcast %60 : vector<64x1xf32> to vector<64x64xf32>
    %62 = arith.subf %58, %61 : vector<64x64xf32>
    %63 = math.exp %62 : vector<64x64xf32>
    %cst_21 = arith.constant dense<0.000000e+00> : vector<64xf32>
    %64 = vector.multi_reduction <add>, %63, %cst_21 [1] : vector<64x64xf32> to vector<64xf32>
    %65 = vector.shape_cast %64 : vector<64xf32> to vector<64x1xf32>
    %66 = tpu.reciprocal %65 {approx = true} : vector<64x1xf32> -> vector<64x1xf32>
    %67 = arith.mulf %65, %66 : vector<64x1xf32>
    %cst_22 = arith.constant 2.000000e+00 : f32
    %68 = vector.broadcast %cst_22 : f32 to vector<64x1xf32>
    %69 = arith.subf %68, %67 : vector<64x1xf32>
    %70 = arith.mulf %66, %69 : vector<64x1xf32>
    %71 = vector.broadcast %70 : vector<64x1xf32> to vector<64x64xf32>
    %72 = arith.mulf %63, %71 : vector<64x64xf32>
    %73 = vector.extract_strided_slice %9 {offsets = [0, 0], sizes = [64, 32], strides = [1, 1]} : vector<64x64xf32> to vector<64x32xf32>
    %cst_23 = arith.constant dense<0.000000e+00> : vector<64x32xf32>
    %74 = tpu.matmul %43, %73, %cst_23 {dimension_numbers = #tpu.dot_dimension_numbers<[1], [0], [0], [1], [0, 0, 1, 1], [], []>} : vector<64x64xf32>, vector<64x32xf32>, vector<64x32xf32> -> vector<64x32xf32>
    %75 = vector.extract_strided_slice %9 {offsets = [0, 32], sizes = [64, 32], strides = [1, 1]} : vector<64x64xf32> to vector<64x32xf32>
    %cst_24 = arith.constant dense<0.000000e+00> : vector<64x32xf32>
    %76 = tpu.matmul %72, %75, %cst_24 {dimension_numbers = #tpu.dot_dimension_numbers<[1], [0], [0], [1], [0, 0, 1, 1], [], []>} : vector<64x64xf32>, vector<64x32xf32>, vector<64x32xf32> -> vector<64x32xf32>
    %77 = tpu.concatenate %74, %76 in 1 : vector<64x32xf32>, vector<64x32xf32> -> vector<64x64xf32>
    %cst_25 = arith.constant 0.000000e+00 : f32
    %78 = vector.broadcast %cst_25 : f32 to vector<64x64xf32>
    %79 = arith.cmpf ogt, %77, %78 : vector<64x64xf32>
    %80 = math.exp %77 : vector<64x64xf32>
    %cst_26 = arith.constant 1.000000e+00 : f32
    %81 = vector.broadcast %cst_26 : f32 to vector<64x64xf32>
    %82 = arith.subf %80, %81 : vector<64x64xf32>
    %83 = arith.select %79, %77, %82 : vector<64x64xi1>, vector<64x64xf32>
    %c0_27 = arith.constant 0 : index
    %c0_28 = arith.constant 0 : index
    %84 = vector.load %arg3[%c0_27, %c0_28] : memref<64x68xf32, #tpu.memory_space<vmem>>, vector<64x68xf32>
    %cst_29 = arith.constant dense<0.000000e+00> : vector<64x68xf32>
    %85 = tpu.matmul %83, %84, %cst_29 {dimension_numbers = #tpu.dot_dimension_numbers<[1], [0], [0], [1], [0, 0, 1, 1], [], []>} : vector<64x64xf32>, vector<64x68xf32>, vector<64x68xf32> -> vector<64x68xf32>
    %86 = vector.extract_strided_slice %85 {offsets = [0, 0], sizes = [64, 64], strides = [1, 1]} : vector<64x68xf32> to vector<64x64xf32>
    %87 = vector.extract_strided_slice %85 {offsets = [0, 64], sizes = [64, 2], strides = [1, 1]} : vector<64x68xf32> to vector<64x2xf32>
    %88 = vector.extract_strided_slice %85 {offsets = [0, 66], sizes = [64, 2], strides = [1, 1]} : vector<64x68xf32> to vector<64x2xf32>
    %cst_30 = arith.constant 0.000000e+00 : f32
    %89 = vector.broadcast %cst_30 : f32 to vector<64x6xf32>
    %90 = tpu.concatenate %87, %89 in 1 : vector<64x2xf32>, vector<64x6xf32> -> vector<64x8xf32>
    %91 = tpu.transpose %90, [1, 0] : vector<64x8xf32> -> vector<8x64xf32>
    %92 = vector.extract_strided_slice %88 {offsets = [0, 0], sizes = [64, 1], strides = [1, 1]} : vector<64x2xf32> to vector<64x1xf32>
    %93 = vector.extract_strided_slice %91 {offsets = [0, 0], sizes = [1, 64], strides = [1, 1]} : vector<8x64xf32> to vector<1x64xf32>
    %94 = vector.broadcast %92 : vector<64x1xf32> to vector<64x64xf32>
    %95 = vector.broadcast %93 : vector<1x64xf32> to vector<64x64xf32>
    %96 = arith.addf %94, %95 : vector<64x64xf32>
    %cst_31 = arith.constant 0.000000e+00 : f32
    %97 = vector.broadcast %cst_31 : f32 to vector<64x64xf32>
    %98 = arith.cmpf oge, %96, %97 : vector<64x64xf32>
    %cst_32 = arith.constant 2.000000e-01 : f32
    %99 = vector.broadcast %cst_32 : f32 to vector<64x64xf32>
    %100 = arith.mulf %99, %96 : vector<64x64xf32>
    %101 = arith.select %98, %96, %100 : vector<64x64xi1>, vector<64x64xf32>
    %102 = arith.mulf %101, %1 : vector<64x64xf32>
    %c0_33 = arith.constant 0 : index
    %c0_34 = arith.constant 0 : index
    %c0_35 = arith.constant 0 : index
    %103 = vector.load %arg7[%c0_33, %c0_34, %c0_35] : memref<2x64x64xf32, #tpu.memory_space<vmem>>, vector<1x64x64xf32>
    %104 = vector.shape_cast %103 : vector<1x64x64xf32> to vector<64x64xf32>
    %105 = vector.shape_cast %102 : vector<64x64xf32> to vector<1x64x64xf32>
    tpu.vector_store %arg7[%c0_33, %c0_34, %c0_35], %105 {strides = array<i32>} : memref<2x64x64xf32, #tpu.memory_space<vmem>>, vector<1x64x64xf32>,
    %106 = arith.addf %101, %5 : vector<64x64xf32>
    %cst_36 = arith.constant dense<0xFF800000> : vector<64xf32>
    %107 = vector.multi_reduction <maximumf>, %106, %cst_36 [1] : vector<64x64xf32> to vector<64xf32>
    %108 = vector.shape_cast %107 : vector<64xf32> to vector<64x1xf32>
    %109 = vector.broadcast %108 : vector<64x1xf32> to vector<64x64xf32>
    %110 = arith.subf %106, %109 : vector<64x64xf32>
    %111 = math.exp %110 : vector<64x64xf32>
    %cst_37 = arith.constant dense<0.000000e+00> : vector<64xf32>
    %112 = vector.multi_reduction <add>, %111, %cst_37 [1] : vector<64x64xf32> to vector<64xf32>
    %113 = vector.shape_cast %112 : vector<64xf32> to vector<64x1xf32>
    %114 = tpu.reciprocal %113 {approx = true} : vector<64x1xf32> -> vector<64x1xf32>
    %115 = arith.mulf %113, %114 : vector<64x1xf32>
    %cst_38 = arith.constant 2.000000e+00 : f32
    %116 = vector.broadcast %cst_38 : f32 to vector<64x1xf32>
    %117 = arith.subf %116, %115 : vector<64x1xf32>
    %118 = arith.mulf %114, %117 : vector<64x1xf32>
    %119 = vector.broadcast %118 : vector<64x1xf32> to vector<64x64xf32>
    %120 = arith.mulf %111, %119 : vector<64x64xf32>
    %121 = vector.extract_strided_slice %88 {offsets = [0, 1], sizes = [64, 1], strides = [1, 1]} : vector<64x2xf32> to vector<64x1xf32>
    %122 = vector.extract_strided_slice %91 {offsets = [1, 0], sizes = [1, 64], strides = [1, 1]} : vector<8x64xf32> to vector<1x64xf32>
    %123 = vector.broadcast %121 : vector<64x1xf32> to vector<64x64xf32>
    %124 = vector.broadcast %122 : vector<1x64xf32> to vector<64x64xf32>
    %125 = arith.addf %123, %124 : vector<64x64xf32>
    %cst_39 = arith.constant 0.000000e+00 : f32
    %126 = vector.broadcast %cst_39 : f32 to vector<64x64xf32>
    %127 = arith.cmpf oge, %125, %126 : vector<64x64xf32>
    %cst_40 = arith.constant 2.000000e-01 : f32
    %128 = vector.broadcast %cst_40 : f32 to vector<64x64xf32>
    %129 = arith.mulf %128, %125 : vector<64x64xf32>
    %130 = arith.select %127, %125, %129 : vector<64x64xi1>, vector<64x64xf32>
    %131 = arith.mulf %130, %1 : vector<64x64xf32>
    %c1_41 = arith.constant 1 : index
    %c0_42 = arith.constant 0 : index
    %c0_43 = arith.constant 0 : index
    %132 = vector.load %arg7[%c1_41, %c0_42, %c0_43] : memref<2x64x64xf32, #tpu.memory_space<vmem>>, vector<1x64x64xf32>
    %133 = vector.shape_cast %132 : vector<1x64x64xf32> to vector<64x64xf32>
    %134 = vector.shape_cast %131 : vector<64x64xf32> to vector<1x64x64xf32>
    tpu.vector_store %arg7[%c1_41, %c0_42, %c0_43], %134 {strides = array<i32>} : memref<2x64x64xf32, #tpu.memory_space<vmem>>, vector<1x64x64xf32>,
    %135 = arith.addf %130, %5 : vector<64x64xf32>
    %cst_44 = arith.constant dense<0xFF800000> : vector<64xf32>
    %136 = vector.multi_reduction <maximumf>, %135, %cst_44 [1] : vector<64x64xf32> to vector<64xf32>
    %137 = vector.shape_cast %136 : vector<64xf32> to vector<64x1xf32>
    %138 = vector.broadcast %137 : vector<64x1xf32> to vector<64x64xf32>
    %139 = arith.subf %135, %138 : vector<64x64xf32>
    %140 = math.exp %139 : vector<64x64xf32>
    %cst_45 = arith.constant dense<0.000000e+00> : vector<64xf32>
    %141 = vector.multi_reduction <add>, %140, %cst_45 [1] : vector<64x64xf32> to vector<64xf32>
    %142 = vector.shape_cast %141 : vector<64xf32> to vector<64x1xf32>
    %143 = tpu.reciprocal %142 {approx = true} : vector<64x1xf32> -> vector<64x1xf32>
    %144 = arith.mulf %142, %143 : vector<64x1xf32>
    %cst_46 = arith.constant 2.000000e+00 : f32
    %145 = vector.broadcast %cst_46 : f32 to vector<64x1xf32>
    %146 = arith.subf %145, %144 : vector<64x1xf32>
    %147 = arith.mulf %143, %146 : vector<64x1xf32>
    %148 = vector.broadcast %147 : vector<64x1xf32> to vector<64x64xf32>
    %149 = arith.mulf %140, %148 : vector<64x64xf32>
    %150 = vector.extract_strided_slice %86 {offsets = [0, 0], sizes = [64, 32], strides = [1, 1]} : vector<64x64xf32> to vector<64x32xf32>
    %cst_47 = arith.constant dense<0.000000e+00> : vector<64x32xf32>
    %151 = tpu.matmul %120, %150, %cst_47 {dimension_numbers = #tpu.dot_dimension_numbers<[1], [0], [0], [1], [0, 0, 1, 1], [], []>} : vector<64x64xf32>, vector<64x32xf32>, vector<64x32xf32> -> vector<64x32xf32>
    %152 = vector.extract_strided_slice %83 {offsets = [0, 0], sizes = [64, 32], strides = [1, 1]} : vector<64x64xf32> to vector<64x32xf32>
    %153 = arith.addf %151, %152 : vector<64x32xf32>
    %154 = vector.extract_strided_slice %86 {offsets = [0, 32], sizes = [64, 32], strides = [1, 1]} : vector<64x64xf32> to vector<64x32xf32>
    %cst_48 = arith.constant dense<0.000000e+00> : vector<64x32xf32>
    %155 = tpu.matmul %149, %154, %cst_48 {dimension_numbers = #tpu.dot_dimension_numbers<[1], [0], [0], [1], [0, 0, 1, 1], [], []>} : vector<64x64xf32>, vector<64x32xf32>, vector<64x32xf32> -> vector<64x32xf32>
    %156 = vector.extract_strided_slice %83 {offsets = [0, 32], sizes = [64, 32], strides = [1, 1]} : vector<64x64xf32> to vector<64x32xf32>
    %157 = arith.addf %155, %156 : vector<64x32xf32>
    %158 = tpu.concatenate %153, %157 in 1 : vector<64x32xf32>, vector<64x32xf32> -> vector<64x64xf32>
    %cst_49 = arith.constant 0.000000e+00 : f32
    %159 = vector.broadcast %cst_49 : f32 to vector<64x64xf32>
    %160 = arith.cmpf ogt, %158, %159 : vector<64x64xf32>
    %161 = math.exp %158 : vector<64x64xf32>
    %cst_50 = arith.constant 1.000000e+00 : f32
    %162 = vector.broadcast %cst_50 : f32 to vector<64x64xf32>
    %163 = arith.subf %161, %162 : vector<64x64xf32>
    %164 = arith.select %160, %158, %163 : vector<64x64xi1>, vector<64x64xf32>
    %cst_51 = arith.constant 0.000000e+00 : f32
    %165 = vector.broadcast %cst_51 : f32 to vector<64x64xf32>
    %166 = arith.cmpf ogt, %164, %165 : vector<64x64xf32>
    %167 = math.exp %164 : vector<64x64xf32>
    %cst_52 = arith.constant 1.000000e+00 : f32
    %168 = vector.broadcast %cst_52 : f32 to vector<64x64xf32>
    %169 = arith.subf %167, %168 : vector<64x64xf32>
    %170 = arith.select %166, %164, %169 : vector<64x64xi1>, vector<64x64xf32>
    %c0_53 = arith.constant 0 : index
    %c0_54 = arith.constant 0 : index
    %171 = vector.load %arg4[%c0_53, %c0_54] : memref<64x10xf32, #tpu.memory_space<vmem>>, vector<64x10xf32>
    %cst_55 = arith.constant dense<0.000000e+00> : vector<64x10xf32>
    %172 = tpu.matmul %170, %171, %cst_55 {dimension_numbers = #tpu.dot_dimension_numbers<[1], [0], [0], [1], [0, 0, 1, 1], [], []>} : vector<64x64xf32>, vector<64x10xf32>, vector<64x10xf32> -> vector<64x10xf32>
    %173 = vector.extract_strided_slice %172 {offsets = [0, 0], sizes = [64, 4], strides = [1, 1]} : vector<64x10xf32> to vector<64x4xf32>
    %174 = vector.extract_strided_slice %172 {offsets = [0, 4], sizes = [64, 4], strides = [1, 1]} : vector<64x10xf32> to vector<64x4xf32>
    %175 = vector.extract_strided_slice %172 {offsets = [0, 8], sizes = [64, 1], strides = [1, 1]} : vector<64x10xf32> to vector<64x1xf32>
    %176 = vector.extract_strided_slice %172 {offsets = [0, 9], sizes = [64, 1], strides = [1, 1]} : vector<64x10xf32> to vector<64x1xf32>
    %cst_56 = arith.constant 0.000000e+00 : f32
    %177 = vector.broadcast %cst_56 : f32 to vector<64x7xf32>
    %178 = tpu.concatenate %175, %177 in 1 : vector<64x1xf32>, vector<64x7xf32> -> vector<64x8xf32>
    %179 = tpu.transpose %178, [1, 0] : vector<64x8xf32> -> vector<8x64xf32>
    %180 = vector.extract_strided_slice %179 {offsets = [0, 0], sizes = [1, 64], strides = [1, 1]} : vector<8x64xf32> to vector<1x64xf32>
    %181 = vector.broadcast %176 : vector<64x1xf32> to vector<64x64xf32>
    %182 = vector.broadcast %180 : vector<1x64xf32> to vector<64x64xf32>
    %183 = arith.addf %181, %182 : vector<64x64xf32>
    %cst_57 = arith.constant 0.000000e+00 : f32
    %184 = vector.broadcast %cst_57 : f32 to vector<64x64xf32>
    %185 = arith.cmpf oge, %183, %184 : vector<64x64xf32>
    %cst_58 = arith.constant 2.000000e-01 : f32
    %186 = vector.broadcast %cst_58 : f32 to vector<64x64xf32>
    %187 = arith.mulf %186, %183 : vector<64x64xf32>
    %188 = arith.select %185, %183, %187 : vector<64x64xi1>, vector<64x64xf32>
    %189 = arith.mulf %188, %1 : vector<64x64xf32>
    %c0_59 = arith.constant 0 : index
    %c0_60 = arith.constant 0 : index
    %c0_61 = arith.constant 0 : index
    %190 = vector.load %arg8[%c0_59, %c0_60, %c0_61] : memref<1x64x64xf32, #tpu.memory_space<vmem>>, vector<1x64x64xf32>
    %191 = vector.shape_cast %190 : vector<1x64x64xf32> to vector<64x64xf32>
    %192 = vector.shape_cast %189 : vector<64x64xf32> to vector<1x64x64xf32>
    tpu.vector_store %arg8[%c0_59, %c0_60, %c0_61], %192 {strides = array<i32>} : memref<1x64x64xf32, #tpu.memory_space<vmem>>, vector<1x64x64xf32>,
    %193 = arith.addf %188, %5 : vector<64x64xf32>
    %cst_62 = arith.constant dense<0xFF800000> : vector<64xf32>
    %194 = vector.multi_reduction <maximumf>, %193, %cst_62 [1] : vector<64x64xf32> to vector<64xf32>
    %195 = vector.shape_cast %194 : vector<64xf32> to vector<64x1xf32>
    %196 = vector.broadcast %195 : vector<64x1xf32> to vector<64x64xf32>
    %197 = arith.subf %193, %196 : vector<64x64xf32>
    %198 = math.exp %197 : vector<64x64xf32>
    %cst_63 = arith.constant dense<0.000000e+00> : vector<64xf32>
    %199 = vector.multi_reduction <add>, %198, %cst_63 [1] : vector<64x64xf32> to vector<64xf32>
    %200 = vector.shape_cast %199 : vector<64xf32> to vector<64x1xf32>
    %201 = tpu.reciprocal %200 {approx = true} : vector<64x1xf32> -> vector<64x1xf32>
    %202 = arith.mulf %200, %201 : vector<64x1xf32>
    %cst_64 = arith.constant 2.000000e+00 : f32
    %203 = vector.broadcast %cst_64 : f32 to vector<64x1xf32>
    %204 = arith.subf %203, %202 : vector<64x1xf32>
    %205 = arith.mulf %201, %204 : vector<64x1xf32>
    %206 = vector.broadcast %205 : vector<64x1xf32> to vector<64x64xf32>
    %207 = arith.mulf %198, %206 : vector<64x64xf32>
    %cst_65 = arith.constant dense<0.000000e+00> : vector<64x4xf32>
    %208 = tpu.matmul %207, %173, %cst_65 {dimension_numbers = #tpu.dot_dimension_numbers<[1], [0], [0], [1], [0, 0, 1, 1], [], []>} : vector<64x64xf32>, vector<64x4xf32>, vector<64x4xf32> -> vector<64x4xf32>
    %209 = arith.addf %208, %174 : vector<64x4xf32>
    %cst_66 = arith.constant 1.000000e+00 : f32
    %210 = vector.broadcast %cst_66 : f32 to vector<64x4xf32>
    %211 = arith.mulf %209, %210 : vector<64x4xf32>
    %cst_67 = arith.constant 0.000000e+00 : f32
    %212 = vector.broadcast %cst_67 : f32 to vector<64x124xf32>
    %213 = tpu.concatenate %211, %212 in 1 : vector<64x4xf32>, vector<64x124xf32> -> vector<64x128xf32>
    %c0_68 = arith.constant 0 : index
    %c0_69 = arith.constant 0 : index
    %214 = vector.load %arg5[%c0_68, %c0_69] : memref<64x128xf32, #tpu.memory_space<vmem>>, vector<64x128xf32>
    tpu.vector_store %arg5[%c0_68, %c0_69], %213 {strides = array<i32>} : memref<64x128xf32, #tpu.memory_space<vmem>>, vector<64x128xf32>,
    return
  }
}

</mosaic_0001>

<llo_original>
// kernel: tpu_custom_call.1
$region0: #{tpu_custom_call.1}
  #allocation0 [shape = 'u32[]', space=smem, size = 0x4, offset = 0x4, fixed_abs, tag = 'smem constant byte address 0x4 - core index']
  #allocation1 [shape = 'u32[72,128]{1,0:T(1,128)}', space=vmem, size = 0x9000, scoped, tag = 'internal scratch']
  %s0 = inlined_call_operand.vmem [shape: f32[64,48], index: 0, kind: input, shape index: {}]
  %s1 = inlined_call_operand.vmem [shape: bf16[64,64], index: 1, kind: input, shape index: {}]
  %s2 = inlined_call_operand.vmem [shape: f32[48,68], index: 2, kind: input, shape index: {}]
  %s3 = inlined_call_operand.vmem [shape: f32[64,68], index: 3, kind: input, shape index: {}]
  %s4 = inlined_call_operand.vmem [shape: f32[64,10], index: 4, kind: input, shape index: {}]
  %s5 = inlined_call_operand.hbm [shape: f32[64,128], index: 5, kind: output, shape index: {0}]
  %s6 = inlined_call_operand.hbm [shape: f32[2,64,64], index: 6, kind: output, shape index: {1}]
  %s7 = inlined_call_operand.hbm [shape: f32[2,64,64], index: 7, kind: output, shape index: {2}]
  %s8 = inlined_call_operand.hbm [shape: f32[1,64,64], index: 8, kind: output, shape index: {3}]
  %9 = xla_tuple %s5, %s6, %s7, %s8
  %s10 = sld [smem:[#allocation0]]
  $region54: #{tpu_custom_call.1} parent=0
    _
  %s12 = ssub.s32 1, %s10
  %s13 = scalar_select 0, %s12, %s10
  $region1: #{tpu_custom_call.1} parent=0
    #allocation2 [shape = 'u8[32768]{0}', space=vmem, size = 0x8000, scoped, tag = 'output window, operand 0, single buffered']
    #allocation3 [shape = 's32[1]{0}', space=sflag, size = 0x4, scoped, tag = 'scoped memory for tpu_custom_call.1']
    #allocation4 [shape = 'u8[65536]{0}', space=vmem, size = 0x10000, scoped, tag = 'output window, operand 1, single buffered']
    #allocation5 [shape = 's32[1]{0}', space=sflag, size = 0x4, scoped, tag = 'scoped memory for tpu_custom_call.1']
    #allocation6 [shape = 'u8[65536]{0}', space=vmem, size = 0x10000, scoped, tag = 'output window, operand 2, single buffered']
    #allocation7 [shape = 'u8[32768]{0}', space=vmem, size = 0x8000, scoped, tag = 'output window, operand 3, single buffered']
    #allocation8 [shape = 's32[1]{0}', space=sflag, size = 0x4, scoped, tag = 'scoped memory for tpu_custom_call.1']
    %14 = vsyncpa [#allocation3], 0
    %15 = vsyncpa [#allocation5], 0
    %16 = vsyncpa [#allocation8], 0
    // Predicated region
    $region2: #{tpu_custom_call.1} parent=1 // pred_check
      _
    $region3: #{tpu_custom_call.1} parent=1 // pred_check_branch
      %18 = sbr.rel (0) target = $region5
    $region4: #{tpu_custom_call.1} parent=1 // pred_region
      _
    $region5: #{tpu_custom_call.1} parent=1 // pred_fallthru
      _
    // Predicated region
    $region6: #{tpu_custom_call.1} parent=1 // pred_check
      _
    $region7: #{tpu_custom_call.1} parent=1 // pred_check_branch
      %20 = sbr.rel (0) target = $region9
    $region8: #{tpu_custom_call.1} parent=1 // pred_region
      _
    $region9: #{tpu_custom_call.1} parent=1 // pred_fallthru
      _
    // Predicated region
    $region10: #{tpu_custom_call.1} parent=1 // pred_check
      _
    $region11: #{tpu_custom_call.1} parent=1 // pred_check_branch
      %22 = sbr.rel (0) target = $region13
    $region12: #{tpu_custom_call.1} parent=1 // pred_region
      _
    $region13: #{tpu_custom_call.1} parent=1 // pred_fallthru
      _
    // Predicated region
    $region14: #{tpu_custom_call.1} parent=1 // pred_check
      _
    $region15: #{tpu_custom_call.1} parent=1 // pred_check_branch
      %24 = sbr.rel (0) target = $region17
    $region16: #{tpu_custom_call.1} parent=1 // pred_region
      _
    $region17: #{tpu_custom_call.1} parent=1 // pred_fallthru
      _
    // Predicated region
    $region18: #{tpu_custom_call.1} parent=1 // pred_check
      _
    $region19: #{tpu_custom_call.1} parent=1 // pred_check_branch
      %26 = sbr.rel (0) target = $region21
    $region20: #{tpu_custom_call.1} parent=1 // pred_region
      _
    $region21: #{tpu_custom_call.1} parent=1 // pred_fallthru
      _
    %v27 = vld [vmem:[%s1] sm:$0xf]
    %v28 = vld [vmem:[%s1 + $0x4] sm:$0xf]
    %v29 = vld [vmem:[%s1 + $0x8] sm:$0xf]
    %v30 = vld [vmem:[%s1 + $0xc] sm:$0xf]
    %v31 = vld [vmem:[%s1 + $0x10] sm:$0xf]
    %v32 = vld [vmem:[%s1 + $0x14] sm:$0xf]
    %v33 = vld [vmem:[%s1 + $0x18] sm:$0xf]
    %v34 = vld [vmem:[%s1 + $0x1c] sm:$0xf]
    %v35 = vunpack.c.l.bf16 %v27
    %v36 = vunpack.c.l.bf16 %v28
    %v37 = vunpack.c.l.bf16 %v29
    %v38 = vunpack.c.l.bf16 %v30
    %v39 = vunpack.c.l.bf16 %v31
    %v40 = vunpack.c.l.bf16 %v32
    %v41 = vunpack.c.l.bf16 %v33
    %v42 = vunpack.c.l.bf16 %v34
    %v43 = vsub.f32 %v35, 1.0
    %v44 = vsub.f32 %v36, 1.0
    %v45 = vsub.f32 %v37, 1.0
    %v46 = vsub.f32 %v38, 1.0
    %v47 = vsub.f32 %v39, 1.0
    %v48 = vsub.f32 %v40, 1.0
    %v49 = vsub.f32 %v41, 1.0
    %v50 = vsub.f32 %v42, 1.0
    %v51 = vmul.f32 %v43, 1e+30
    %v52 = vmul.f32 %v44, 1e+30
    %v53 = vmul.f32 %v45, 1e+30
    %v54 = vmul.f32 %v46, 1e+30
    %v55 = vmul.f32 %v47, 1e+30
    %v56 = vmul.f32 %v48, 1e+30
    %v57 = vmul.f32 %v49, 1e+30
    %v58 = vmul.f32 %v50, 1e+30
    %v59 = vld [vmem:[%s0] sm:$0xff]
    %v60 = vld [vmem:[%s0 + $0x8] sm:$0xff]
    %v61 = vld [vmem:[%s0 + $0x10] sm:$0xff]
    %v62 = vld [vmem:[%s0 + $0x18] sm:$0xff]
    %v63 = vld [vmem:[%s0 + $0x20] sm:$0xff]
    %v64 = vld [vmem:[%s0 + $0x28] sm:$0xff]
    %v65 = vld [vmem:[%s0 + $0x30] sm:$0xff]
    %v66 = vld [vmem:[%s0 + $0x38] sm:$0xff]
    %v67 = vld [vmem:[%s2] sm:$0xff]
    %v68 = vld [vmem:[%s2 + $0x8] sm:$0xff]
    %v69 = vld [vmem:[%s2 + $0x10] sm:$0xff]
    %v70 = vld [vmem:[%s2 + $0x18] sm:$0xff]
    %v71 = vld [vmem:[%s2 + $0x20] sm:$0xff]
    %v72 = vld [vmem:[%s2 + $0x28] sm:$0xff]
    %vm73 = vcmask 392192
    %v75 = vsel %vm73, %v59, 0
    %v78 = vsel %vm73, %v60, 0
    %v81 = vsel %vm73, %v61, 0
    %v84 = vsel %vm73, %v62, 0
    %v87 = vsel %vm73, %v63, 0
    %v90 = vsel %vm73, %v64, 0
    %v93 = vsel %vm73, %v65, 0
    %v96 = vsel %vm73, %v66, 0
    %98 = vmatpush.msra.mxu0 0.0
    %99 = vmatpush.msra.mxu0 0.0
    %100 = vmatpush.msra.mxu0 0.0
    %101 = vmatpush.msra.mxu0 0.0
    %102 = vmatpush.msra.mxu0 0.0
    %103 = vmatpush.msra.mxu0 0.0
    %104 = vmatpush.msra.mxu0 0.0
    %105 = vmatpush.msra.mxu0 0.0
    %106 = vmatpush.msra.mxu0 0.0
    %107 = vmatpush.msra.mxu0 0.0
    %108 = vmatpush.msra.mxu0 %v72
    %109 = vmatpush.msra.mxu0 %v71
    %110 = vmatpush.msra.mxu0 %v70
    %111 = vmatpush.msra.mxu0 %v69
    %112 = vmatpush.msra.mxu0 %v68
    %113 = vmatpush.msra.mxu0 %v67
    %114 = vmatmul.f32.gmra.mxu0 %v75
    %v115 = vpop.f32.mrf.mxu0
    %v116 = vadd.f32 0.0, %v115
    %117 = vmatmul.f32.gmra.mxu0 %v78
    %v118 = vpop.f32.mrf.mxu0
    %v119 = vadd.f32 0.0, %v118
    %120 = vmatmul.f32.gmra.mxu0 %v81
    %v121 = vpop.f32.mrf.mxu0
    %v122 = vadd.f32 0.0, %v121
    %123 = vmatmul.f32.gmra.mxu0 %v84
    %v124 = vpop.f32.mrf.mxu0
    %v125 = vadd.f32 0.0, %v124
    %126 = vmatmul.f32.gmra.mxu0 %v87
    %v127 = vpop.f32.mrf.mxu0
    %v128 = vadd.f32 0.0, %v127
    %129 = vmatmul.f32.gmra.mxu0 %v90
    %v130 = vpop.f32.mrf.mxu0
    %v131 = vadd.f32 0.0, %v130
    %132 = vmatmul.f32.gmra.mxu0 %v93
    %v133 = vpop.f32.mrf.mxu0
    %v134 = vadd.f32 0.0, %v133
    %135 = vmatmul.f32.gmra.mxu0 %v96
    %v136 = vpop.f32.mrf.mxu0
    %v137 = vadd.f32 0.0, %v136
    %138 = vdwg.mxu0
    %147 = vrot.lane.b32.xlu0 %v116, 64
    %v148 = vpop.permute.xlu0 %147
    %149 = vrot.lane.b32.xlu0 %v119, 64
    %v150 = vpop.permute.xlu0 %149
    %151 = vrot.lane.b32.xlu0 %v122, 64
    %v152 = vpop.permute.xlu0 %151
    %153 = vrot.lane.b32.xlu0 %v125, 64
    %v154 = vpop.permute.xlu0 %153
    %155 = vrot.lane.b32.xlu0 %v128, 64
    %v156 = vpop.permute.xlu0 %155
    %157 = vrot.lane.b32.xlu0 %v131, 64
    %v158 = vpop.permute.xlu0 %157
    %159 = vrot.lane.b32.xlu0 %v134, 64
    %v160 = vpop.permute.xlu0 %159
    %161 = vrot.lane.b32.xlu0 %v137, 64
    %v162 = vpop.permute.xlu0 %161
    %vm171 = vcmask 15360
    %v172 = vsel %vm171, %v148, 0.0
    %v173 = vsel %vm171, %v150, 0.0
    %v174 = vsel %vm171, %v152, 0.0
    %v175 = vsel %vm171, %v154, 0.0
    %v176 = vsel %vm171, %v156, 0.0
    %v177 = vsel %vm171, %v158, 0.0
    %v178 = vsel %vm171, %v160, 0.0
    %v179 = vsel %vm171, %v162, 0.0
    %180 = vxpose.xlu0.b32.start [1/16] %v172, 128
    %181 = vxpose.xlu0.b32.cont [2/16] %v173, 128
    %182 = vxpose.xlu0.b32.cont [3/16] %v174, 128
    %183 = vxpose.xlu0.b32.cont [4/16] %v175, 128
    %184 = vxpose.xlu0.b32.cont [5/16] %v176, 128
    %185 = vxpose.xlu0.b32.cont [6/16] %v177, 128
    %186 = vxpose.xlu0.b32.cont [7/16] %v178, 128
    %187 = vxpose.xlu0.b32.cont [8/16] %v179, 128
    %188 = vxpose.xlu0.b32.cont [9/16] 0.0, 128
    %189 = vxpose.xlu0.b32.cont [10/16] 0.0, 128
    %190 = vxpose.xlu0.b32.cont [11/16] 0.0, 128
    %191 = vxpose.xlu0.b32.cont [12/16] 0.0, 128
    %192 = vxpose.xlu0.b32.cont [13/16] 0.0, 128
    %193 = vxpose.xlu0.b32.cont [14/16] 0.0, 128
    %194 = vxpose.xlu0.b32.cont [15/16] 0.0, 128
    %195 = vxpose.xlu0.b32.end [16/16] 0.0, 128
    %v196 = vpop.trf.xlu0
    %v197 = vpop.trf.xlu0
    %v198 = vpop.trf.xlu0
    %v199 = vpop.trf.xlu0
    %v200 = vpop.trf.xlu0
    %v201 = vpop.trf.xlu0
    %v202 = vpop.trf.xlu0
    %v203 = vpop.trf.xlu0
    %v204 = vpop.trf.xlu0
    %v205 = vpop.trf.xlu0
    %v206 = vpop.trf.xlu0
    %v207 = vpop.trf.xlu0
    %v208 = vpop.trf.xlu0
    %v209 = vpop.trf.xlu0
    %v210 = vpop.trf.xlu0
    %v211 = vpop.trf.xlu0
    %212 = vset.pattern.permute.xlu0 66
    %213 = vperm.xlu0 %212, %v116
    %v214 = vpop.permute.xlu0 %213
    %216 = vset.pattern.permute.xlu0 66
    %217 = vperm.xlu0 %216, %v119
    %v218 = vpop.permute.xlu0 %217
    %220 = vset.pattern.permute.xlu0 66
    %221 = vperm.xlu0 %220, %v122
    %v222 = vpop.permute.xlu0 %221
    %224 = vset.pattern.permute.xlu0 66
    %225 = vperm.xlu0 %224, %v125
    %v226 = vpop.permute.xlu0 %225
    %228 = vset.pattern.permute.xlu0 66
    %229 = vperm.xlu0 %228, %v128
    %v230 = vpop.permute.xlu0 %229
    %232 = vset.pattern.permute.xlu0 66
    %233 = vperm.xlu0 %232, %v131
    %v234 = vpop.permute.xlu0 %233
    %236 = vset.pattern.permute.xlu0 66
    %237 = vperm.xlu0 %236, %v134
    %v238 = vpop.permute.xlu0 %237
    %240 = vset.pattern.permute.xlu0 66
    %241 = vperm.xlu0 %240, %v137
    %v242 = vpop.permute.xlu0 %241
    %v244 = vperm.slane %v196, 0
    %v245 = vadd.f32 %v214, %v244
    %v246 = vadd.f32 %v218, %v244
    %v247 = vadd.f32 %v222, %v244
    %v248 = vadd.f32 %v226, %v244
    %v249 = vadd.f32 %v230, %v244
    %v250 = vadd.f32 %v234, %v244
    %v251 = vadd.f32 %v238, %v244
    %v252 = vadd.f32 %v242, %v244
    %vm253 = vcmp.ge.f32.partialorder %v245, 0.0
    %vm254 = vcmp.ge.f32.partialorder %v246, 0.0
    %vm255 = vcmp.ge.f32.partialorder %v247, 0.0
    %vm256 = vcmp.ge.f32.partialorder %v248, 0.0
    %vm257 = vcmp.ge.f32.partialorder %v249, 0.0
    %vm258 = vcmp.ge.f32.partialorder %v250, 0.0
    %vm259 = vcmp.ge.f32.partialorder %v251, 0.0
    %vm260 = vcmp.ge.f32.partialorder %v252, 0.0
    %v261 = vmul.f32 %v245, 0.2
    %v262 = vmul.f32 %v246, 0.2
    %v263 = vmul.f32 %v247, 0.2
    %v264 = vmul.f32 %v248, 0.2
    %v265 = vmul.f32 %v249, 0.2
    %v266 = vmul.f32 %v250, 0.2
    %v267 = vmul.f32 %v251, 0.2
    %v268 = vmul.f32 %v252, 0.2
    %v269 = vsel %vm253, %v245, %v261
    %v270 = vsel %vm254, %v246, %v262
    %v271 = vsel %vm255, %v247, %v263
    %v272 = vsel %vm256, %v248, %v264
    %v273 = vsel %vm257, %v249, %v265
    %v274 = vsel %vm258, %v250, %v266
    %v275 = vsel %vm259, %v251, %v267
    %v276 = vsel %vm260, %v252, %v268
    %v277 = vmul.f32 %v269, %v35
    %v278 = vmul.f32 %v270, %v36
    %v279 = vmul.f32 %v271, %v37
    %v280 = vmul.f32 %v272, %v38
    %v281 = vmul.f32 %v273, %v39
    %v282 = vmul.f32 %v274, %v40
    %v283 = vmul.f32 %v275, %v41
    %v284 = vmul.f32 %v276, %v42
    %vm285 = vcmask 523264
    %286 = vst.msk [vmem:[#allocation4] sm:$0xff] %vm285, %v277
    %287 = vst.msk [vmem:[#allocation4 + $0x8] sm:$0xff] %vm285, %v278
    %288 = vst.msk [vmem:[#allocation4 + $0x10] sm:$0xff] %vm285, %v279
    %289 = vst.msk [vmem:[#allocation4 + $0x18] sm:$0xff] %vm285, %v280
    %290 = vst.msk [vmem:[#allocation4 + $0x20] sm:$0xff] %vm285, %v281
    %291 = vst.msk [vmem:[#allocation4 + $0x28] sm:$0xff] %vm285, %v282
    %292 = vst.msk [vmem:[#allocation4 + $0x30] sm:$0xff] %vm285, %v283
    %293 = vst.msk [vmem:[#allocation4 + $0x38] sm:$0xff] %vm285, %v284
    %v294 = vadd.f32 %v269, %v51
    %v295 = vadd.f32 %v270, %v52
    %v296 = vadd.f32 %v271, %v53
    %v297 = vadd.f32 %v272, %v54
    %v298 = vadd.f32 %v273, %v55
    %v299 = vadd.f32 %v274, %v56
    %v300 = vadd.f32 %v275, %v57
    %v301 = vadd.f32 %v276, %v58
    %v302 = vsel %vm285, %v294, -inf
    %303 = vmax.xlane.f32.xlu0 %v302
    %v304 = vpop.xlane.xlu0 %303
    %v305 = vsel %vm285, %v295, -inf
    %306 = vmax.xlane.f32.xlu0 %v305
    %v307 = vpop.xlane.xlu0 %306
    %v308 = vsel %vm285, %v296, -inf
    %309 = vmax.xlane.f32.xlu0 %v308
    %v310 = vpop.xlane.xlu0 %309
    %v311 = vsel %vm285, %v297, -inf
    %312 = vmax.xlane.f32.xlu0 %v311
    %v313 = vpop.xlane.xlu0 %312
    %v314 = vsel %vm285, %v298, -inf
    %315 = vmax.xlane.f32.xlu0 %v314
    %v316 = vpop.xlane.xlu0 %315
    %v317 = vsel %vm285, %v299, -inf
    %318 = vmax.xlane.f32.xlu0 %v317
    %v319 = vpop.xlane.xlu0 %318
    %v320 = vsel %vm285, %v300, -inf
    %321 = vmax.xlane.f32.xlu0 %v320
    %v322 = vpop.xlane.xlu0 %321
    %v323 = vsel %vm285, %v301, -inf
    %324 = vmax.xlane.f32.xlu0 %v323
    %v325 = vpop.xlane.xlu0 %324
    %v326 = vsub.f32 %v294, %v304
    %v327 = vsub.f32 %v295, %v307
    %v328 = vsub.f32 %v296, %v310
    %v329 = vsub.f32 %v297, %v313
    %v330 = vsub.f32 %v298, %v316
    %v331 = vsub.f32 %v299, %v319
    %v332 = vsub.f32 %v300, %v322
    %v333 = vsub.f32 %v301, %v325
    %v334 = vmul.f32 %v326, 1.442695
    %v335 = vpow.pop %v334
    %v336 = vmul.f32 %v327, 1.442695
    %v337 = vpow.pop %v336
    %v338 = vmul.f32 %v328, 1.442695
    %v339 = vpow.pop %v338
    %v340 = vmul.f32 %v329, 1.442695
    %v341 = vpow.pop %v340
    %v342 = vmul.f32 %v330, 1.442695
    %v343 = vpow.pop %v342
    %v344 = vmul.f32 %v331, 1.442695
    %v345 = vpow.pop %v344
    %v346 = vmul.f32 %v332, 1.442695
    %v347 = vpow.pop %v346
    %v348 = vmul.f32 %v333, 1.442695
    %v349 = vpow.pop %v348
    %v350 = vsel %vm285, %v335, 0.0
    %351 = vadd.xlane.f32.xlu0 %v350
    %v352 = vpop.xlane.xlu0 %351
    %v353 = vsel %vm285, %v337, 0.0
    %354 = vadd.xlane.f32.xlu0 %v353
    %v355 = vpop.xlane.xlu0 %354
    %v356 = vsel %vm285, %v339, 0.0
    %357 = vadd.xlane.f32.xlu0 %v356
    %v358 = vpop.xlane.xlu0 %357
    %v359 = vsel %vm285, %v341, 0.0
    %360 = vadd.xlane.f32.xlu0 %v359
    %v361 = vpop.xlane.xlu0 %360
    %v362 = vsel %vm285, %v343, 0.0
    %363 = vadd.xlane.f32.xlu0 %v362
    %v364 = vpop.xlane.xlu0 %363
    %v365 = vsel %vm285, %v345, 0.0
    %366 = vadd.xlane.f32.xlu0 %v365
    %v367 = vpop.xlane.xlu0 %366
    %v368 = vsel %vm285, %v347, 0.0
    %369 = vadd.xlane.f32.xlu0 %v368
    %v370 = vpop.xlane.xlu0 %369
    %v371 = vsel %vm285, %v349, 0.0
    %372 = vadd.xlane.f32.xlu0 %v371
    %v373 = vpop.xlane.xlu0 %372
    %v374 = vrcp.pop %v352
    %v375 = vrcp.pop %v355
    %v376 = vrcp.pop %v358
    %v377 = vrcp.pop %v361
    %v378 = vrcp.pop %v364
    %v379 = vrcp.pop %v367
    %v380 = vrcp.pop %v370
    %v381 = vrcp.pop %v373
    %v382 = vmul.f32 %v352, %v374
    %v383 = vmul.f32 %v355, %v375
    %v384 = vmul.f32 %v358, %v376
    %v385 = vmul.f32 %v361, %v377
    %v386 = vmul.f32 %v364, %v378
    %v387 = vmul.f32 %v367, %v379
    %v388 = vmul.f32 %v370, %v380
    %v389 = vmul.f32 %v373, %v381
    %v390 = vsub.f32 2.0, %v382
    %v391 = vsub.f32 2.0, %v383
    %v392 = vsub.f32 2.0, %v384
    %v393 = vsub.f32 2.0, %v385
    %v394 = vsub.f32 2.0, %v386
    %v395 = vsub.f32 2.0, %v387
    %v396 = vsub.f32 2.0, %v388
    %v397 = vsub.f32 2.0, %v389
    %v398 = vmul.f32 %v374, %v390
    %v399 = vmul.f32 %v375, %v391
    %v400 = vmul.f32 %v376, %v392
    %v401 = vmul.f32 %v377, %v393
    %v402 = vmul.f32 %v378, %v394
    %v403 = vmul.f32 %v379, %v395
    %v404 = vmul.f32 %v380, %v396
    %v405 = vmul.f32 %v381, %v397
    %v406 = vmul.f32 %v335, %v398
    %v407 = vmul.f32 %v337, %v399
    %v408 = vmul.f32 %v339, %v400
    %v409 = vmul.f32 %v341, %v401
    %v410 = vmul.f32 %v343, %v402
    %v411 = vmul.f32 %v345, %v403
    %v412 = vmul.f32 %v347, %v404
    %v413 = vmul.f32 %v349, %v405
    %414 = vset.pattern.permute.xlu0 67
    %415 = vperm.xlu0 %414, %v116
    %v416 = vpop.permute.xlu0 %415
    %418 = vset.pattern.permute.xlu0 67
    %419 = vperm.xlu0 %418, %v119
    %v420 = vpop.permute.xlu0 %419
    %422 = vset.pattern.permute.xlu0 67
    %423 = vperm.xlu0 %422, %v122
    %v424 = vpop.permute.xlu0 %423
    %426 = vset.pattern.permute.xlu0 67
    %427 = vperm.xlu0 %426, %v125
    %v428 = vpop.permute.xlu0 %427
    %430 = vset.pattern.permute.xlu0 67
    %431 = vperm.xlu0 %430, %v128
    %v432 = vpop.permute.xlu0 %431
    %434 = vset.pattern.permute.xlu0 67
    %435 = vperm.xlu0 %434, %v131
    %v436 = vpop.permute.xlu0 %435
    %438 = vset.pattern.permute.xlu0 67
    %439 = vperm.xlu0 %438, %v134
    %v440 = vpop.permute.xlu0 %439
    %442 = vset.pattern.permute.xlu0 67
    %443 = vperm.xlu0 %442, %v137
    %v444 = vpop.permute.xlu0 %443
    %v446 = vperm.slane %v196, 1
    %v447 = vadd.f32 %v416, %v446
    %v448 = vadd.f32 %v420, %v446
    %v449 = vadd.f32 %v424, %v446
    %v450 = vadd.f32 %v428, %v446
    %v451 = vadd.f32 %v432, %v446
    %v452 = vadd.f32 %v436, %v446
    %v453 = vadd.f32 %v440, %v446
    %v454 = vadd.f32 %v444, %v446
    %vm455 = vcmp.ge.f32.partialorder %v447, 0.0
    %vm456 = vcmp.ge.f32.partialorder %v448, 0.0
    %vm457 = vcmp.ge.f32.partialorder %v449, 0.0
    %vm458 = vcmp.ge.f32.partialorder %v450, 0.0
    %vm459 = vcmp.ge.f32.partialorder %v451, 0.0
    %vm460 = vcmp.ge.f32.partialorder %v452, 0.0
    %vm461 = vcmp.ge.f32.partialorder %v453, 0.0
    %vm462 = vcmp.ge.f32.partialorder %v454, 0.0
    %v463 = vmul.f32 %v447, 0.2
    %v464 = vmul.f32 %v448, 0.2
    %v465 = vmul.f32 %v449, 0.2
    %v466 = vmul.f32 %v450, 0.2
    %v467 = vmul.f32 %v451, 0.2
    %v468 = vmul.f32 %v452, 0.2
    %v469 = vmul.f32 %v453, 0.2
    %v470 = vmul.f32 %v454, 0.2
    %v471 = vsel %vm455, %v447, %v463
    %v472 = vsel %vm456, %v448, %v464
    %v473 = vsel %vm457, %v449, %v465
    %v474 = vsel %vm458, %v450, %v466
    %v475 = vsel %vm459, %v451, %v467
    %v476 = vsel %vm460, %v452, %v468
    %v477 = vsel %vm461, %v453, %v469
    %v478 = vsel %vm462, %v454, %v470
    %v479 = vmul.f32 %v471, %v35
    %v480 = vmul.f32 %v472, %v36
    %v481 = vmul.f32 %v473, %v37
    %v482 = vmul.f32 %v474, %v38
    %v483 = vmul.f32 %v475, %v39
    %v484 = vmul.f32 %v476, %v40
    %v485 = vmul.f32 %v477, %v41
    %v486 = vmul.f32 %v478, %v42
    %s487 = scalar_lea.vmem [#allocation4], 64
    %488 = vst.msk [vmem:[%s487] sm:$0xff] %vm285, %v479
    %489 = vst.msk [vmem:[%s487 + $0x8] sm:$0xff] %vm285, %v480
    %490 = vst.msk [vmem:[%s487 + $0x10] sm:$0xff] %vm285, %v481
    %491 = vst.msk [vmem:[%s487 + $0x18] sm:$0xff] %vm285, %v482
    %492 = vst.msk [vmem:[%s487 + $0x20] sm:$0xff] %vm285, %v483
    %493 = vst.msk [vmem:[%s487 + $0x28] sm:$0xff] %vm285, %v484
    %494 = vst.msk [vmem:[%s487 + $0x30] sm:$0xff] %vm285, %v485
    %495 = vst.msk [vmem:[%s487 + $0x38] sm:$0xff] %vm285, %v486
    %v496 = vadd.f32 %v471, %v51
    %v497 = vadd.f32 %v472, %v52
    %v498 = vadd.f32 %v473, %v53
    %v499 = vadd.f32 %v474, %v54
    %v500 = vadd.f32 %v475, %v55
    %v501 = vadd.f32 %v476, %v56
    %v502 = vadd.f32 %v477, %v57
    %v503 = vadd.f32 %v478, %v58
    %v504 = vsel %vm285, %v496, -inf
    %505 = vmax.xlane.f32.xlu0 %v504
    %v506 = vpop.xlane.xlu0 %505
    %v507 = vsel %vm285, %v497, -inf
    %508 = vmax.xlane.f32.xlu0 %v507
    %v509 = vpop.xlane.xlu0 %508
    %v510 = vsel %vm285, %v498, -inf
    %511 = vmax.xlane.f32.xlu0 %v510
    %v512 = vpop.xlane.xlu0 %511
    %v513 = vsel %vm285, %v499, -inf
    %514 = vmax.xlane.f32.xlu0 %v513
    %v515 = vpop.xlane.xlu0 %514
    %v516 = vsel %vm285, %v500, -inf
    %517 = vmax.xlane.f32.xlu0 %v516
    %v518 = vpop.xlane.xlu0 %517
    %v519 = vsel %vm285, %v501, -inf
    %520 = vmax.xlane.f32.xlu0 %v519
    %v521 = vpop.xlane.xlu0 %520
    %v522 = vsel %vm285, %v502, -inf
    %523 = vmax.xlane.f32.xlu0 %v522
    %v524 = vpop.xlane.xlu0 %523
    %v525 = vsel %vm285, %v503, -inf
    %526 = vmax.xlane.f32.xlu0 %v525
    %v527 = vpop.xlane.xlu0 %526
    %v528 = vsub.f32 %v496, %v506
    %v529 = vsub.f32 %v497, %v509
    %v530 = vsub.f32 %v498, %v512
    %v531 = vsub.f32 %v499, %v515
    %v532 = vsub.f32 %v500, %v518
    %v533 = vsub.f32 %v501, %v521
    %v534 = vsub.f32 %v502, %v524
    %v535 = vsub.f32 %v503, %v527
    %v536 = vmul.f32 %v528, 1.442695
    %v537 = vpow.pop %v536
    %v538 = vmul.f32 %v529, 1.442695
    %v539 = vpow.pop %v538
    %v540 = vmul.f32 %v530, 1.442695
    %v541 = vpow.pop %v540
    %v542 = vmul.f32 %v531, 1.442695
    %v543 = vpow.pop %v542
    %v544 = vmul.f32 %v532, 1.442695
    %v545 = vpow.pop %v544
    %v546 = vmul.f32 %v533, 1.442695
    %v547 = vpow.pop %v546
    %v548 = vmul.f32 %v534, 1.442695
    %v549 = vpow.pop %v548
    %v550 = vmul.f32 %v535, 1.442695
    %v551 = vpow.pop %v550
    %v552 = vsel %vm285, %v537, 0.0
    %553 = vadd.xlane.f32.xlu0 %v552
    %v554 = vpop.xlane.xlu0 %553
    %v555 = vsel %vm285, %v539, 0.0
    %556 = vadd.xlane.f32.xlu0 %v555
    %v557 = vpop.xlane.xlu0 %556
    %v558 = vsel %vm285, %v541, 0.0
    %559 = vadd.xlane.f32.xlu0 %v558
    %v560 = vpop.xlane.xlu0 %559
    %v561 = vsel %vm285, %v543, 0.0
    %562 = vadd.xlane.f32.xlu0 %v561
    %v563 = vpop.xlane.xlu0 %562
    %v564 = vsel %vm285, %v545, 0.0
    %565 = vadd.xlane.f32.xlu0 %v564
    %v566 = vpop.xlane.xlu0 %565
    %v567 = vsel %vm285, %v547, 0.0
    %568 = vadd.xlane.f32.xlu0 %v567
    %v569 = vpop.xlane.xlu0 %568
    %v570 = vsel %vm285, %v549, 0.0
    %571 = vadd.xlane.f32.xlu0 %v570
    %v572 = vpop.xlane.xlu0 %571
    %v573 = vsel %vm285, %v551, 0.0
    %574 = vadd.xlane.f32.xlu0 %v573
    %v575 = vpop.xlane.xlu0 %574
    %v576 = vrcp.pop %v554
    %v577 = vrcp.pop %v557
    %v578 = vrcp.pop %v560
    %v579 = vrcp.pop %v563
    %v580 = vrcp.pop %v566
    %v581 = vrcp.pop %v569
    %v582 = vrcp.pop %v572
    %v583 = vrcp.pop %v575
    %v584 = vmul.f32 %v554, %v576
    %v585 = vmul.f32 %v557, %v577
    %v586 = vmul.f32 %v560, %v578
    %v587 = vmul.f32 %v563, %v579
    %v588 = vmul.f32 %v566, %v580
    %v589 = vmul.f32 %v569, %v581
    %v590 = vmul.f32 %v572, %v582
    %v591 = vmul.f32 %v575, %v583
    %v592 = vsub.f32 2.0, %v584
    %v593 = vsub.f32 2.0, %v585
    %v594 = vsub.f32 2.0, %v586
    %v595 = vsub.f32 2.0, %v587
    %v596 = vsub.f32 2.0, %v588
    %v597 = vsub.f32 2.0, %v589
    %v598 = vsub.f32 2.0, %v590
    %v599 = vsub.f32 2.0, %v591
    %v600 = vmul.f32 %v576, %v592
    %v601 = vmul.f32 %v577, %v593
    %v602 = vmul.f32 %v578, %v594
    %v603 = vmul.f32 %v579, %v595
    %v604 = vmul.f32 %v580, %v596
    %v605 = vmul.f32 %v581, %v597
    %v606 = vmul.f32 %v582, %v598
    %v607 = vmul.f32 %v583, %v599
    %v608 = vmul.f32 %v537, %v600
    %v609 = vmul.f32 %v539, %v601
    %v610 = vmul.f32 %v541, %v602
    %v611 = vmul.f32 %v543, %v603
    %v612 = vmul.f32 %v545, %v604
    %v613 = vmul.f32 %v547, %v605
    %v614 = vmul.f32 %v549, %v606
    %v615 = vmul.f32 %v551, %v607
    %v617 = vsel %vm285, %v406, 0
    %v620 = vsel %vm285, %v407, 0
    %v623 = vsel %vm285, %v408, 0
    %v626 = vsel %vm285, %v409, 0
    %v629 = vsel %vm285, %v410, 0
    %v632 = vsel %vm285, %v411, 0
    %v635 = vsel %vm285, %v412, 0
    %v638 = vsel %vm285, %v413, 0
    %640 = vmatpush.msra.mxu0 0.0
    %641 = vmatpush.msra.mxu0 0.0
    %642 = vmatpush.msra.mxu0 0.0
    %643 = vmatpush.msra.mxu0 0.0
    %644 = vmatpush.msra.mxu0 0.0
    %645 = vmatpush.msra.mxu0 0.0
    %646 = vmatpush.msra.mxu0 0.0
    %647 = vmatpush.msra.mxu0 0.0
    %648 = vmatpush.msra.mxu0 %v137
    %649 = vmatpush.msra.mxu0 %v134
    %650 = vmatpush.msra.mxu0 %v131
    %651 = vmatpush.msra.mxu0 %v128
    %652 = vmatpush.msra.mxu0 %v125
    %653 = vmatpush.msra.mxu0 %v122
    %654 = vmatpush.msra.mxu0 %v119
    %655 = vmatpush.msra.mxu0 %v116
    %656 = vmatmul.f32.gmra.mxu0 %v617
    %v657 = vpop.f32.mrf.mxu0
    %v658 = vadd.f32 0.0, %v657
    %659 = vmatmul.f32.gmra.mxu0 %v620
    %v660 = vpop.f32.mrf.mxu0
    %v661 = vadd.f32 0.0, %v660
    %662 = vmatmul.f32.gmra.mxu0 %v623
    %v663 = vpop.f32.mrf.mxu0
    %v664 = vadd.f32 0.0, %v663
    %665 = vmatmul.f32.gmra.mxu0 %v626
    %v666 = vpop.f32.mrf.mxu0
    %v667 = vadd.f32 0.0, %v666
    %668 = vmatmul.f32.gmra.mxu0 %v629
    %v669 = vpop.f32.mrf.mxu0
    %v670 = vadd.f32 0.0, %v669
    %671 = vmatmul.f32.gmra.mxu0 %v632
    %v672 = vpop.f32.mrf.mxu0
    %v673 = vadd.f32 0.0, %v672
    %674 = vmatmul.f32.gmra.mxu0 %v635
    %v675 = vpop.f32.mrf.mxu0
    %v676 = vadd.f32 0.0, %v675
    %677 = vmatmul.f32.gmra.mxu0 %v638
    %v678 = vpop.f32.mrf.mxu0
    %v679 = vadd.f32 0.0, %v678
    %680 = vdwg.mxu0
    %681 = vrot.lane.b32.xlu0 %v116, 96
    %v682 = vpop.permute.xlu0 %681
    %683 = vrot.lane.b32.xlu0 %v119, 96
    %v684 = vpop.permute.xlu0 %683
    %685 = vrot.lane.b32.xlu0 %v122, 96
    %v686 = vpop.permute.xlu0 %685
    %687 = vrot.lane.b32.xlu0 %v125, 96
    %v688 = vpop.permute.xlu0 %687
    %689 = vrot.lane.b32.xlu0 %v128, 96
    %v690 = vpop.permute.xlu0 %689
    %691 = vrot.lane.b32.xlu0 %v131, 96
    %v692 = vpop.permute.xlu0 %691
    %693 = vrot.lane.b32.xlu0 %v134, 96
    %v694 = vpop.permute.xlu0 %693
    %695 = vrot.lane.b32.xlu0 %v137, 96
    %v696 = vpop.permute.xlu0 %695
    %v706 = vsel %vm285, %v608, 0
    %v709 = vsel %vm285, %v609, 0
    %v712 = vsel %vm285, %v610, 0
    %v715 = vsel %vm285, %v611, 0
    %v718 = vsel %vm285, %v612, 0
    %v721 = vsel %vm285, %v613, 0
    %v724 = vsel %vm285, %v614, 0
    %v727 = vsel %vm285, %v615, 0
    %729 = vmatpush.msra.mxu0 0.0
    %730 = vmatpush.msra.mxu0 0.0
    %731 = vmatpush.msra.mxu0 0.0
    %732 = vmatpush.msra.mxu0 0.0
    %733 = vmatpush.msra.mxu0 0.0
    %734 = vmatpush.msra.mxu0 0.0
    %735 = vmatpush.msra.mxu0 0.0
    %736 = vmatpush.msra.mxu0 0.0
    %737 = vmatpush.msra.mxu0 %v696
    %738 = vmatpush.msra.mxu0 %v694
    %739 = vmatpush.msra.mxu0 %v692
    %740 = vmatpush.msra.mxu0 %v690
    %741 = vmatpush.msra.mxu0 %v688
    %742 = vmatpush.msra.mxu0 %v686
    %743 = vmatpush.msra.mxu0 %v684
    %744 = vmatpush.msra.mxu0 %v682
    %745 = vmatmul.f32.gmra.mxu0 %v706
    %v746 = vpop.f32.mrf.mxu0
    %v747 = vadd.f32 0.0, %v746
    %748 = vmatmul.f32.gmra.mxu0 %v709
    %v749 = vpop.f32.mrf.mxu0
    %v750 = vadd.f32 0.0, %v749
    %751 = vmatmul.f32.gmra.mxu0 %v712
    %v752 = vpop.f32.mrf.mxu0
    %v753 = vadd.f32 0.0, %v752
    %754 = vmatmul.f32.gmra.mxu0 %v715
    %v755 = vpop.f32.mrf.mxu0
    %v756 = vadd.f32 0.0, %v755
    %757 = vmatmul.f32.gmra.mxu0 %v718
    %v758 = vpop.f32.mrf.mxu0
    %v759 = vadd.f32 0.0, %v758
    %760 = vmatmul.f32.gmra.mxu0 %v721
    %v761 = vpop.f32.mrf.mxu0
    %v762 = vadd.f32 0.0, %v761
    %763 = vmatmul.f32.gmra.mxu0 %v724
    %v764 = vpop.f32.mrf.mxu0
    %v765 = vadd.f32 0.0, %v764
    %766 = vmatmul.f32.gmra.mxu0 %v727
    %v767 = vpop.f32.mrf.mxu0
    %v768 = vadd.f32 0.0, %v767
    %769 = vdwg.mxu0
    %778 = vrot.lane.b32.xlu0 %v747, 32
    %v779 = vpop.permute.xlu0 %778
    %780 = vrot.lane.b32.xlu0 %v750, 32
    %v781 = vpop.permute.xlu0 %780
    %782 = vrot.lane.b32.xlu0 %v753, 32
    %v783 = vpop.permute.xlu0 %782
    %784 = vrot.lane.b32.xlu0 %v756, 32
    %v785 = vpop.permute.xlu0 %784
    %786 = vrot.lane.b32.xlu0 %v759, 32
    %v787 = vpop.permute.xlu0 %786
    %788 = vrot.lane.b32.xlu0 %v762, 32
    %v789 = vpop.permute.xlu0 %788
    %790 = vrot.lane.b32.xlu0 %v765, 32
    %v791 = vpop.permute.xlu0 %790
    %792 = vrot.lane.b32.xlu0 %v768, 32
    %v793 = vpop.permute.xlu0 %792
    %vm802 = vcmask 261120
    %v803 = vsel %vm802, %v658, %v779
    %v804 = vsel %vm802, %v661, %v781
    %v805 = vsel %vm802, %v664, %v783
    %v806 = vsel %vm802, %v667, %v785
    %v807 = vsel %vm802, %v670, %v787
    %v808 = vsel %vm802, %v673, %v789
    %v809 = vsel %vm802, %v676, %v791
    %v810 = vsel %vm802, %v679, %v793
    %vm811 = vcmp.gt.f32.partialorder %v803, 0.0
    %vm812 = vcmp.gt.f32.partialorder %v804, 0.0
    %vm813 = vcmp.gt.f32.partialorder %v805, 0.0
    %vm814 = vcmp.gt.f32.partialorder %v806, 0.0
    %vm815 = vcmp.gt.f32.partialorder %v807, 0.0
    %vm816 = vcmp.gt.f32.partialorder %v808, 0.0
    %vm817 = vcmp.gt.f32.partialorder %v809, 0.0
    %vm818 = vcmp.gt.f32.partialorder %v810, 0.0
    %v819 = vmul.f32 %v803, 1.442695
    %v820 = vpow.pop %v819
    %v821 = vmul.f32 %v804, 1.442695
    %v822 = vpow.pop %v821
    %v823 = vmul.f32 %v805, 1.442695
    %v824 = vpow.pop %v823
    %v825 = vmul.f32 %v806, 1.442695
    %v826 = vpow.pop %v825
    %v827 = vmul.f32 %v807, 1.442695
    %v828 = vpow.pop %v827
    %v829 = vmul.f32 %v808, 1.442695
    %v830 = vpow.pop %v829
    %v831 = vmul.f32 %v809, 1.442695
    %v832 = vpow.pop %v831
    %v833 = vmul.f32 %v810, 1.442695
    %v834 = vpow.pop %v833
    %v835 = vsub.f32 %v820, 1.0
    %v836 = vsub.f32 %v822, 1.0
    %v837 = vsub.f32 %v824, 1.0
    %v838 = vsub.f32 %v826, 1.0
    %v839 = vsub.f32 %v828, 1.0
    %v840 = vsub.f32 %v830, 1.0
    %v841 = vsub.f32 %v832, 1.0
    %v842 = vsub.f32 %v834, 1.0
    %v843 = vsel %vm811, %v803, %v835
    %v844 = vsel %vm812, %v804, %v836
    %v845 = vsel %vm813, %v805, %v837
    %v846 = vsel %vm814, %v806, %v838
    %v847 = vsel %vm815, %v807, %v839
    %v848 = vsel %vm816, %v808, %v840
    %v849 = vsel %vm817, %v809, %v841
    %v850 = vsel %vm818, %v810, %v842
    %v851 = vld [vmem:[%s3] sm:$0xff]
    %v852 = vld [vmem:[%s3 + $0x8] sm:$0xff]
    %v853 = vld [vmem:[%s3 + $0x10] sm:$0xff]
    %v854 = vld [vmem:[%s3 + $0x18] sm:$0xff]
    %v855 = vld [vmem:[%s3 + $0x20] sm:$0xff]
    %v856 = vld [vmem:[%s3 + $0x28] sm:$0xff]
    %v857 = vld [vmem:[%s3 + $0x30] sm:$0xff]
    %v858 = vld [vmem:[%s3 + $0x38] sm:$0xff]
    %v860 = vsel %vm285, %v843, 0
    %v863 = vsel %vm285, %v844, 0
    %v866 = vsel %vm285, %v845, 0
    %v869 = vsel %vm285, %v846, 0
    %v872 = vsel %vm285, %v847, 0
    %v875 = vsel %vm285, %v848, 0
    %v878 = vsel %vm285, %v849, 0
    %v881 = vsel %vm285, %v850, 0
    %883 = vmatpush.msra.mxu0 0.0
    %884 = vmatpush.msra.mxu0 0.0
    %885 = vmatpush.msra.mxu0 0.0
    %886 = vmatpush.msra.mxu0 0.0
    %887 = vmatpush.msra.mxu0 0.0
    %888 = vmatpush.msra.mxu0 0.0
    %889 = vmatpush.msra.mxu0 0.0
    %890 = vmatpush.msra.mxu0 0.0
    %891 = vmatpush.msra.mxu0 %v858
    %892 = vmatpush.msra.mxu0 %v857
    %893 = vmatpush.msra.mxu0 %v856
    %894 = vmatpush.msra.mxu0 %v855
    %895 = vmatpush.msra.mxu0 %v854
    %896 = vmatpush.msra.mxu0 %v853
    %897 = vmatpush.msra.mxu0 %v852
    %898 = vmatpush.msra.mxu0 %v851
    %899 = vmatmul.f32.gmra.mxu0 %v860
    %v900 = vpop.f32.mrf.mxu0
    %v901 = vadd.f32 0.0, %v900
    %902 = vmatmul.f32.gmra.mxu0 %v863
    %v903 = vpop.f32.mrf.mxu0
    %v904 = vadd.f32 0.0, %v903
    %905 = vmatmul.f32.gmra.mxu0 %v866
    %v906 = vpop.f32.mrf.mxu0
    %v907 = vadd.f32 0.0, %v906
    %908 = vmatmul.f32.gmra.mxu0 %v869
    %v909 = vpop.f32.mrf.mxu0
    %v910 = vadd.f32 0.0, %v909
    %911 = vmatmul.f32.gmra.mxu0 %v872
    %v912 = vpop.f32.mrf.mxu0
    %v913 = vadd.f32 0.0, %v912
    %914 = vmatmul.f32.gmra.mxu0 %v875
    %v915 = vpop.f32.mrf.mxu0
    %v916 = vadd.f32 0.0, %v915
    %917 = vmatmul.f32.gmra.mxu0 %v878
    %v918 = vpop.f32.mrf.mxu0
    %v919 = vadd.f32 0.0, %v918
    %920 = vmatmul.f32.gmra.mxu0 %v881
    %v921 = vpop.f32.mrf.mxu0
    %v922 = vadd.f32 0.0, %v921
    %923 = vdwg.mxu0
    %932 = vrot.lane.b32.xlu0 %v901, 64
    %v933 = vpop.permute.xlu0 %932
    %934 = vrot.lane.b32.xlu0 %v904, 64
    %v935 = vpop.permute.xlu0 %934
    %936 = vrot.lane.b32.xlu0 %v907, 64
    %v937 = vpop.permute.xlu0 %936
    %938 = vrot.lane.b32.xlu0 %v910, 64
    %v939 = vpop.permute.xlu0 %938
    %940 = vrot.lane.b32.xlu0 %v913, 64
    %v941 = vpop.permute.xlu0 %940
    %942 = vrot.lane.b32.xlu0 %v916, 64
    %v943 = vpop.permute.xlu0 %942
    %944 = vrot.lane.b32.xlu0 %v919, 64
    %v945 = vpop.permute.xlu0 %944
    %946 = vrot.lane.b32.xlu0 %v922, 64
    %v947 = vpop.permute.xlu0 %946
    %v956 = vsel %vm171, %v933, 0.0
    %v957 = vsel %vm171, %v935, 0.0
    %v958 = vsel %vm171, %v937, 0.0
    %v959 = vsel %vm171, %v939, 0.0
    %v960 = vsel %vm171, %v941, 0.0
    %v961 = vsel %vm171, %v943, 0.0
    %v962 = vsel %vm171, %v945, 0.0
    %v963 = vsel %vm171, %v947, 0.0
    %964 = vxpose.xlu0.b32.start [1/16] %v956, 128
    %965 = vxpose.xlu0.b32.cont [2/16] %v957, 128
    %966 = vxpose.xlu0.b32.cont [3/16] %v958, 128
    %967 = vxpose.xlu0.b32.cont [4/16] %v959, 128
    %968 = vxpose.xlu0.b32.cont [5/16] %v960, 128
    %969 = vxpose.xlu0.b32.cont [6/16] %v961, 128
    %970 = vxpose.xlu0.b32.cont [7/16] %v962, 128
    %971 = vxpose.xlu0.b32.cont [8/16] %v963, 128
    %972 = vxpose.xlu0.b32.cont [9/16] 0.0, 128
    %973 = vxpose.xlu0.b32.cont [10/16] 0.0, 128
    %974 = vxpose.xlu0.b32.cont [11/16] 0.0, 128
    %975 = vxpose.xlu0.b32.cont [12/16] 0.0, 128
    %976 = vxpose.xlu0.b32.cont [13/16] 0.0, 128
    %977 = vxpose.xlu0.b32.cont [14/16] 0.0, 128
    %978 = vxpose.xlu0.b32.cont [15/16] 0.0, 128
    %979 = vxpose.xlu0.b32.end [16/16] 0.0, 128
    %v980 = vpop.trf.xlu0
    %v981 = vpop.trf.xlu0
    %v982 = vpop.trf.xlu0
    %v983 = vpop.trf.xlu0
    %v984 = vpop.trf.xlu0
    %v985 = vpop.trf.xlu0
    %v986 = vpop.trf.xlu0
    %v987 = vpop.trf.xlu0
    %v988 = vpop.trf.xlu0
    %v989 = vpop.trf.xlu0
    %v990 = vpop.trf.xlu0
    %v991 = vpop.trf.xlu0
    %v992 = vpop.trf.xlu0
    %v993 = vpop.trf.xlu0
    %v994 = vpop.trf.xlu0
    %v995 = vpop.trf.xlu0
    %996 = vset.pattern.permute.xlu0 66
    %997 = vperm.xlu0 %996, %v901
    %v998 = vpop.permute.xlu0 %997
    %1000 = vset.pattern.permute.xlu0 66
    %1001 = vperm.xlu0 %1000, %v904
    %v1002 = vpop.permute.xlu0 %1001
    %1004 = vset.pattern.permute.xlu0 66
    %1005 = vperm.xlu0 %1004, %v907
    %v1006 = vpop.permute.xlu0 %1005
    %1008 = vset.pattern.permute.xlu0 66
    %1009 = vperm.xlu0 %1008, %v910
    %v1010 = vpop.permute.xlu0 %1009
    %1012 = vset.pattern.permute.xlu0 66
    %1013 = vperm.xlu0 %1012, %v913
    %v1014 = vpop.permute.xlu0 %1013
    %1016 = vset.pattern.permute.xlu0 66
    %1017 = vperm.xlu0 %1016, %v916
    %v1018 = vpop.permute.xlu0 %1017
    %1020 = vset.pattern.permute.xlu0 66
    %1021 = vperm.xlu0 %1020, %v919
    %v1022 = vpop.permute.xlu0 %1021
    %1024 = vset.pattern.permute.xlu0 66
    %1025 = vperm.xlu0 %1024, %v922
    %v1026 = vpop.permute.xlu0 %1025
    %v1028 = vperm.slane %v980, 0
    %v1029 = vadd.f32 %v998, %v1028
    %v1030 = vadd.f32 %v1002, %v1028
    %v1031 = vadd.f32 %v1006, %v1028
    %v1032 = vadd.f32 %v1010, %v1028
    %v1033 = vadd.f32 %v1014, %v1028
    %v1034 = vadd.f32 %v1018, %v1028
    %v1035 = vadd.f32 %v1022, %v1028
    %v1036 = vadd.f32 %v1026, %v1028
    %vm1037 = vcmp.ge.f32.partialorder %v1029, 0.0
    %vm1038 = vcmp.ge.f32.partialorder %v1030, 0.0
    %vm1039 = vcmp.ge.f32.partialorder %v1031, 0.0
    %vm1040 = vcmp.ge.f32.partialorder %v1032, 0.0
    %vm1041 = vcmp.ge.f32.partialorder %v1033, 0.0
    %vm1042 = vcmp.ge.f32.partialorder %v1034, 0.0
    %vm1043 = vcmp.ge.f32.partialorder %v1035, 0.0
    %vm1044 = vcmp.ge.f32.partialorder %v1036, 0.0
    %v1045 = vmul.f32 %v1029, 0.2
    %v1046 = vmul.f32 %v1030, 0.2
    %v1047 = vmul.f32 %v1031, 0.2
    %v1048 = vmul.f32 %v1032, 0.2
    %v1049 = vmul.f32 %v1033, 0.2
    %v1050 = vmul.f32 %v1034, 0.2
    %v1051 = vmul.f32 %v1035, 0.2
    %v1052 = vmul.f32 %v1036, 0.2
    %v1053 = vsel %vm1037, %v1029, %v1045
    %v1054 = vsel %vm1038, %v1030, %v1046
    %v1055 = vsel %vm1039, %v1031, %v1047
    %v1056 = vsel %vm1040, %v1032, %v1048
    %v1057 = vsel %vm1041, %v1033, %v1049
    %v1058 = vsel %vm1042, %v1034, %v1050
    %v1059 = vsel %vm1043, %v1035, %v1051
    %v1060 = vsel %vm1044, %v1036, %v1052
    %v1061 = vmul.f32 %v1053, %v35
    %v1062 = vmul.f32 %v1054, %v36
    %v1063 = vmul.f32 %v1055, %v37
    %v1064 = vmul.f32 %v1056, %v38
    %v1065 = vmul.f32 %v1057, %v39
    %v1066 = vmul.f32 %v1058, %v40
    %v1067 = vmul.f32 %v1059, %v41
    %v1068 = vmul.f32 %v1060, %v42
    %1069 = vst.msk [vmem:[#allocation6] sm:$0xff] %vm285, %v1061
    %1070 = vst.msk [vmem:[#allocation6 + $0x8] sm:$0xff] %vm285, %v1062
    %1071 = vst.msk [vmem:[#allocation6 + $0x10] sm:$0xff] %vm285, %v1063
    %1072 = vst.msk [vmem:[#allocation6 + $0x18] sm:$0xff] %vm285, %v1064
    %1073 = vst.msk [vmem:[#allocation6 + $0x20] sm:$0xff] %vm285, %v1065
    %1074 = vst.msk [vmem:[#allocation6 + $0x28] sm:$0xff] %vm285, %v1066
    %1075 = vst.msk [vmem:[#allocation6 + $0x30] sm:$0xff] %vm285, %v1067
    %1076 = vst.msk [vmem:[#allocation6 + $0x38] sm:$0xff] %vm285, %v1068
    %v1077 = vadd.f32 %v1053, %v51
    %v1078 = vadd.f32 %v1054, %v52
    %v1079 = vadd.f32 %v1055, %v53
    %v1080 = vadd.f32 %v1056, %v54
    %v1081 = vadd.f32 %v1057, %v55
    %v1082 = vadd.f32 %v1058, %v56
    %v1083 = vadd.f32 %v1059, %v57
    %v1084 = vadd.f32 %v1060, %v58
    %v1085 = vsel %vm285, %v1077, -inf
    %1086 = vmax.xlane.f32.xlu0 %v1085
    %v1087 = vpop.xlane.xlu0 %1086
    %v1088 = vsel %vm285, %v1078, -inf
    %1089 = vmax.xlane.f32.xlu0 %v1088
    %v1090 = vpop.xlane.xlu0 %1089
    %v1091 = vsel %vm285, %v1079, -inf
    %1092 = vmax.xlane.f32.xlu0 %v1091
    %v1093 = vpop.xlane.xlu0 %1092
    %v1094 = vsel %vm285, %v1080, -inf
    %1095 = vmax.xlane.f32.xlu0 %v1094
    %v1096 = vpop.xlane.xlu0 %1095
    %v1097 = vsel %vm285, %v1081, -inf
    %1098 = vmax.xlane.f32.xlu0 %v1097
    %v1099 = vpop.xlane.xlu0 %1098
    %v1100 = vsel %vm285, %v1082, -inf
    %1101 = vmax.xlane.f32.xlu0 %v1100
    %v1102 = vpop.xlane.xlu0 %1101
    %v1103 = vsel %vm285, %v1083, -inf
    %1104 = vmax.xlane.f32.xlu0 %v1103
    %v1105 = vpop.xlane.xlu0 %1104
    %v1106 = vsel %vm285, %v1084, -inf
    %1107 = vmax.xlane.f32.xlu0 %v1106
    %v1108 = vpop.xlane.xlu0 %1107
    %v1109 = vsub.f32 %v1077, %v1087
    %v1110 = vsub.f32 %v1078, %v1090
    %v1111 = vsub.f32 %v1079, %v1093
    %v1112 = vsub.f32 %v1080, %v1096
    %v1113 = vsub.f32 %v1081, %v1099
    %v1114 = vsub.f32 %v1082, %v1102
    %v1115 = vsub.f32 %v1083, %v1105
    %v1116 = vsub.f32 %v1084, %v1108
    %v1117 = vmul.f32 %v1109, 1.442695
    %v1118 = vpow.pop %v1117
    %v1119 = vmul.f32 %v1110, 1.442695
    %v1120 = vpow.pop %v1119
    %v1121 = vmul.f32 %v1111, 1.442695
    %v1122 = vpow.pop %v1121
    %v1123 = vmul.f32 %v1112, 1.442695
    %v1124 = vpow.pop %v1123
    %v1125 = vmul.f32 %v1113, 1.442695
    %v1126 = vpow.pop %v1125
    %v1127 = vmul.f32 %v1114, 1.442695
    %v1128 = vpow.pop %v1127
    %v1129 = vmul.f32 %v1115, 1.442695
    %v1130 = vpow.pop %v1129
    %v1131 = vmul.f32 %v1116, 1.442695
    %v1132 = vpow.pop %v1131
    %v1133 = vsel %vm285, %v1118, 0.0
    %1134 = vadd.xlane.f32.xlu0 %v1133
    %v1135 = vpop.xlane.xlu0 %1134
    %v1136 = vsel %vm285, %v1120, 0.0
    %1137 = vadd.xlane.f32.xlu0 %v1136
    %v1138 = vpop.xlane.xlu0 %1137
    %v1139 = vsel %vm285, %v1122, 0.0
    %1140 = vadd.xlane.f32.xlu0 %v1139
    %v1141 = vpop.xlane.xlu0 %1140
    %v1142 = vsel %vm285, %v1124, 0.0
    %1143 = vadd.xlane.f32.xlu0 %v1142
    %v1144 = vpop.xlane.xlu0 %1143
    %v1145 = vsel %vm285, %v1126, 0.0
    %1146 = vadd.xlane.f32.xlu0 %v1145
    %v1147 = vpop.xlane.xlu0 %1146
    %v1148 = vsel %vm285, %v1128, 0.0
    %1149 = vadd.xlane.f32.xlu0 %v1148
    %v1150 = vpop.xlane.xlu0 %1149
    %v1151 = vsel %vm285, %v1130, 0.0
    %1152 = vadd.xlane.f32.xlu0 %v1151
    %v1153 = vpop.xlane.xlu0 %1152
    %v1154 = vsel %vm285, %v1132, 0.0
    %1155 = vadd.xlane.f32.xlu0 %v1154
    %v1156 = vpop.xlane.xlu0 %1155
    %v1157 = vrcp.pop %v1135
    %v1158 = vrcp.pop %v1138
    %v1159 = vrcp.pop %v1141
    %v1160 = vrcp.pop %v1144
    %v1161 = vrcp.pop %v1147
    %v1162 = vrcp.pop %v1150
    %v1163 = vrcp.pop %v1153
    %v1164 = vrcp.pop %v1156
    %v1165 = vmul.f32 %v1135, %v1157
    %v1166 = vmul.f32 %v1138, %v1158
    %v1167 = vmul.f32 %v1141, %v1159
    %v1168 = vmul.f32 %v1144, %v1160
    %v1169 = vmul.f32 %v1147, %v1161
    %v1170 = vmul.f32 %v1150, %v1162
    %v1171 = vmul.f32 %v1153, %v1163
    %v1172 = vmul.f32 %v1156, %v1164
    %v1173 = vsub.f32 2.0, %v1165
    %v1174 = vsub.f32 2.0, %v1166
    %v1175 = vsub.f32 2.0, %v1167
    %v1176 = vsub.f32 2.0, %v1168
    %v1177 = vsub.f32 2.0, %v1169
    %v1178 = vsub.f32 2.0, %v1170
    %v1179 = vsub.f32 2.0, %v1171
    %v1180 = vsub.f32 2.0, %v1172
    %v1181 = vmul.f32 %v1157, %v1173
    %v1182 = vmul.f32 %v1158, %v1174
    %v1183 = vmul.f32 %v1159, %v1175
    %v1184 = vmul.f32 %v1160, %v1176
    %v1185 = vmul.f32 %v1161, %v1177
    %v1186 = vmul.f32 %v1162, %v1178
    %v1187 = vmul.f32 %v1163, %v1179
    %v1188 = vmul.f32 %v1164, %v1180
    %v1189 = vmul.f32 %v1118, %v1181
    %v1190 = vmul.f32 %v1120, %v1182
    %v1191 = vmul.f32 %v1122, %v1183
    %v1192 = vmul.f32 %v1124, %v1184
    %v1193 = vmul.f32 %v1126, %v1185
    %v1194 = vmul.f32 %v1128, %v1186
    %v1195 = vmul.f32 %v1130, %v1187
    %v1196 = vmul.f32 %v1132, %v1188
    %1197 = vset.pattern.permute.xlu0 67
    %1198 = vperm.xlu0 %1197, %v901
    %v1199 = vpop.permute.xlu0 %1198
    %1201 = vset.pattern.permute.xlu0 67
    %1202 = vperm.xlu0 %1201, %v904
    %v1203 = vpop.permute.xlu0 %1202
    %1205 = vset.pattern.permute.xlu0 67
    %1206 = vperm.xlu0 %1205, %v907
    %v1207 = vpop.permute.xlu0 %1206
    %1209 = vset.pattern.permute.xlu0 67
    %1210 = vperm.xlu0 %1209, %v910
    %v1211 = vpop.permute.xlu0 %1210
    %1213 = vset.pattern.permute.xlu0 67
    %1214 = vperm.xlu0 %1213, %v913
    %v1215 = vpop.permute.xlu0 %1214
    %1217 = vset.pattern.permute.xlu0 67
    %1218 = vperm.xlu0 %1217, %v916
    %v1219 = vpop.permute.xlu0 %1218
    %1221 = vset.pattern.permute.xlu0 67
    %1222 = vperm.xlu0 %1221, %v919
    %v1223 = vpop.permute.xlu0 %1222
    %1225 = vset.pattern.permute.xlu0 67
    %1226 = vperm.xlu0 %1225, %v922
    %v1227 = vpop.permute.xlu0 %1226
    %v1229 = vperm.slane %v980, 1
    %v1230 = vadd.f32 %v1199, %v1229
    %v1231 = vadd.f32 %v1203, %v1229
    %v1232 = vadd.f32 %v1207, %v1229
    %v1233 = vadd.f32 %v1211, %v1229
    %v1234 = vadd.f32 %v1215, %v1229
    %v1235 = vadd.f32 %v1219, %v1229
    %v1236 = vadd.f32 %v1223, %v1229
    %v1237 = vadd.f32 %v1227, %v1229
    %vm1238 = vcmp.ge.f32.partialorder %v1230, 0.0
    %vm1239 = vcmp.ge.f32.partialorder %v1231, 0.0
    %vm1240 = vcmp.ge.f32.partialorder %v1232, 0.0
    %vm1241 = vcmp.ge.f32.partialorder %v1233, 0.0
    %vm1242 = vcmp.ge.f32.partialorder %v1234, 0.0
    %vm1243 = vcmp.ge.f32.partialorder %v1235, 0.0
    %vm1244 = vcmp.ge.f32.partialorder %v1236, 0.0
    %vm1245 = vcmp.ge.f32.partialorder %v1237, 0.0
    %v1246 = vmul.f32 %v1230, 0.2
    %v1247 = vmul.f32 %v1231, 0.2
    %v1248 = vmul.f32 %v1232, 0.2
    %v1249 = vmul.f32 %v1233, 0.2
    %v1250 = vmul.f32 %v1234, 0.2
    %v1251 = vmul.f32 %v1235, 0.2
    %v1252 = vmul.f32 %v1236, 0.2
    %v1253 = vmul.f32 %v1237, 0.2
    %v1254 = vsel %vm1238, %v1230, %v1246
    %v1255 = vsel %vm1239, %v1231, %v1247
    %v1256 = vsel %vm1240, %v1232, %v1248
    %v1257 = vsel %vm1241, %v1233, %v1249
    %v1258 = vsel %vm1242, %v1234, %v1250
    %v1259 = vsel %vm1243, %v1235, %v1251
    %v1260 = vsel %vm1244, %v1236, %v1252
    %v1261 = vsel %vm1245, %v1237, %v1253
    %v1262 = vmul.f32 %v1254, %v35
    %v1263 = vmul.f32 %v1255, %v36
    %v1264 = vmul.f32 %v1256, %v37
    %v1265 = vmul.f32 %v1257, %v38
    %v1266 = vmul.f32 %v1258, %v39
    %v1267 = vmul.f32 %v1259, %v40
    %v1268 = vmul.f32 %v1260, %v41
    %v1269 = vmul.f32 %v1261, %v42
    %s1270 = scalar_lea.vmem [#allocation6], 64
    %1271 = vst.msk [vmem:[%s1270] sm:$0xff] %vm285, %v1262
    %1272 = vst.msk [vmem:[%s1270 + $0x8] sm:$0xff] %vm285, %v1263
    %1273 = vst.msk [vmem:[%s1270 + $0x10] sm:$0xff] %vm285, %v1264
    %1274 = vst.msk [vmem:[%s1270 + $0x18] sm:$0xff] %vm285, %v1265
    %1275 = vst.msk [vmem:[%s1270 + $0x20] sm:$0xff] %vm285, %v1266
    %1276 = vst.msk [vmem:[%s1270 + $0x28] sm:$0xff] %vm285, %v1267
    %1277 = vst.msk [vmem:[%s1270 + $0x30] sm:$0xff] %vm285, %v1268
    %1278 = vst.msk [vmem:[%s1270 + $0x38] sm:$0xff] %vm285, %v1269
    %v1279 = vadd.f32 %v1254, %v51
    %v1280 = vadd.f32 %v1255, %v52
    %v1281 = vadd.f32 %v1256, %v53
    %v1282 = vadd.f32 %v1257, %v54
    %v1283 = vadd.f32 %v1258, %v55
    %v1284 = vadd.f32 %v1259, %v56
    %v1285 = vadd.f32 %v1260, %v57
    %v1286 = vadd.f32 %v1261, %v58
    %v1287 = vsel %vm285, %v1279, -inf
    %1288 = vmax.xlane.f32.xlu0 %v1287
    %v1289 = vpop.xlane.xlu0 %1288
    %v1290 = vsel %vm285, %v1280, -inf
    %1291 = vmax.xlane.f32.xlu0 %v1290
    %v1292 = vpop.xlane.xlu0 %1291
    %v1293 = vsel %vm285, %v1281, -inf
    %1294 = vmax.xlane.f32.xlu0 %v1293
    %v1295 = vpop.xlane.xlu0 %1294
    %v1296 = vsel %vm285, %v1282, -inf
    %1297 = vmax.xlane.f32.xlu0 %v1296
    %v1298 = vpop.xlane.xlu0 %1297
    %v1299 = vsel %vm285, %v1283, -inf
    %1300 = vmax.xlane.f32.xlu0 %v1299
    %v1301 = vpop.xlane.xlu0 %1300
    %v1302 = vsel %vm285, %v1284, -inf
    %1303 = vmax.xlane.f32.xlu0 %v1302
    %v1304 = vpop.xlane.xlu0 %1303
    %v1305 = vsel %vm285, %v1285, -inf
    %1306 = vmax.xlane.f32.xlu0 %v1305
    %v1307 = vpop.xlane.xlu0 %1306
    %v1308 = vsel %vm285, %v1286, -inf
    %1309 = vmax.xlane.f32.xlu0 %v1308
    %v1310 = vpop.xlane.xlu0 %1309
    %v1311 = vsub.f32 %v1279, %v1289
    %v1312 = vsub.f32 %v1280, %v1292
    %v1313 = vsub.f32 %v1281, %v1295
    %v1314 = vsub.f32 %v1282, %v1298
    %v1315 = vsub.f32 %v1283, %v1301
    %v1316 = vsub.f32 %v1284, %v1304
    %v1317 = vsub.f32 %v1285, %v1307
    %v1318 = vsub.f32 %v1286, %v1310
    %v1319 = vmul.f32 %v1311, 1.442695
    %v1320 = vpow.pop %v1319
    %v1321 = vmul.f32 %v1312, 1.442695
    %v1322 = vpow.pop %v1321
    %v1323 = vmul.f32 %v1313, 1.442695
    %v1324 = vpow.pop %v1323
    %v1325 = vmul.f32 %v1314, 1.442695
    %v1326 = vpow.pop %v1325
    %v1327 = vmul.f32 %v1315, 1.442695
    %v1328 = vpow.pop %v1327
    %v1329 = vmul.f32 %v1316, 1.442695
    %v1330 = vpow.pop %v1329
    %v1331 = vmul.f32 %v1317, 1.442695
    %v1332 = vpow.pop %v1331
    %v1333 = vmul.f32 %v1318, 1.442695
    %v1334 = vpow.pop %v1333
    %v1335 = vsel %vm285, %v1320, 0.0
    %1336 = vadd.xlane.f32.xlu0 %v1335
    %v1337 = vpop.xlane.xlu0 %1336
    %v1338 = vsel %vm285, %v1322, 0.0
    %1339 = vadd.xlane.f32.xlu0 %v1338
    %v1340 = vpop.xlane.xlu0 %1339
    %v1341 = vsel %vm285, %v1324, 0.0
    %1342 = vadd.xlane.f32.xlu0 %v1341
    %v1343 = vpop.xlane.xlu0 %1342
    %v1344 = vsel %vm285, %v1326, 0.0
    %1345 = vadd.xlane.f32.xlu0 %v1344
    %v1346 = vpop.xlane.xlu0 %1345
    %v1347 = vsel %vm285, %v1328, 0.0
    %1348 = vadd.xlane.f32.xlu0 %v1347
    %v1349 = vpop.xlane.xlu0 %1348
    %v1350 = vsel %vm285, %v1330, 0.0
    %1351 = vadd.xlane.f32.xlu0 %v1350
    %v1352 = vpop.xlane.xlu0 %1351
    %v1353 = vsel %vm285, %v1332, 0.0
    %1354 = vadd.xlane.f32.xlu0 %v1353
    %v1355 = vpop.xlane.xlu0 %1354
    %v1356 = vsel %vm285, %v1334, 0.0
    %1357 = vadd.xlane.f32.xlu0 %v1356
    %v1358 = vpop.xlane.xlu0 %1357
    %v1359 = vrcp.pop %v1337
    %v1360 = vrcp.pop %v1340
    %v1361 = vrcp.pop %v1343
    %v1362 = vrcp.pop %v1346
    %v1363 = vrcp.pop %v1349
    %v1364 = vrcp.pop %v1352
    %v1365 = vrcp.pop %v1355
    %v1366 = vrcp.pop %v1358
    %v1367 = vmul.f32 %v1337, %v1359
    %v1368 = vmul.f32 %v1340, %v1360
    %v1369 = vmul.f32 %v1343, %v1361
    %v1370 = vmul.f32 %v1346, %v1362
    %v1371 = vmul.f32 %v1349, %v1363
    %v1372 = vmul.f32 %v1352, %v1364
    %v1373 = vmul.f32 %v1355, %v1365
    %v1374 = vmul.f32 %v1358, %v1366
    %v1375 = vsub.f32 2.0, %v1367
    %v1376 = vsub.f32 2.0, %v1368
    %v1377 = vsub.f32 2.0, %v1369
    %v1378 = vsub.f32 2.0, %v1370
    %v1379 = vsub.f32 2.0, %v1371
    %v1380 = vsub.f32 2.0, %v1372
    %v1381 = vsub.f32 2.0, %v1373
    %v1382 = vsub.f32 2.0, %v1374
    %v1383 = vmul.f32 %v1359, %v1375
    %v1384 = vmul.f32 %v1360, %v1376
    %v1385 = vmul.f32 %v1361, %v1377
    %v1386 = vmul.f32 %v1362, %v1378
    %v1387 = vmul.f32 %v1363, %v1379
    %v1388 = vmul.f32 %v1364, %v1380
    %v1389 = vmul.f32 %v1365, %v1381
    %v1390 = vmul.f32 %v1366, %v1382
    %v1391 = vmul.f32 %v1320, %v1383
    %v1392 = vmul.f32 %v1322, %v1384
    %v1393 = vmul.f32 %v1324, %v1385
    %v1394 = vmul.f32 %v1326, %v1386
    %v1395 = vmul.f32 %v1328, %v1387
    %v1396 = vmul.f32 %v1330, %v1388
    %v1397 = vmul.f32 %v1332, %v1389
    %v1398 = vmul.f32 %v1334, %v1390
    %v1400 = vsel %vm285, %v1189, 0
    %v1403 = vsel %vm285, %v1190, 0
    %v1406 = vsel %vm285, %v1191, 0
    %v1409 = vsel %vm285, %v1192, 0
    %v1412 = vsel %vm285, %v1193, 0
    %v1415 = vsel %vm285, %v1194, 0
    %v1418 = vsel %vm285, %v1195, 0
    %v1421 = vsel %vm285, %v1196, 0
    %1423 = vmatpush.msra.mxu0 0.0
    %1424 = vmatpush.msra.mxu0 0.0
    %1425 = vmatpush.msra.mxu0 0.0
    %1426 = vmatpush.msra.mxu0 0.0
    %1427 = vmatpush.msra.mxu0 0.0
    %1428 = vmatpush.msra.mxu0 0.0
    %1429 = vmatpush.msra.mxu0 0.0
    %1430 = vmatpush.msra.mxu0 0.0
    %1431 = vmatpush.msra.mxu0 %v922
    %1432 = vmatpush.msra.mxu0 %v919
    %1433 = vmatpush.msra.mxu0 %v916
    %1434 = vmatpush.msra.mxu0 %v913
    %1435 = vmatpush.msra.mxu0 %v910
    %1436 = vmatpush.msra.mxu0 %v907
    %1437 = vmatpush.msra.mxu0 %v904
    %1438 = vmatpush.msra.mxu0 %v901
    %1439 = vmatmul.f32.gmra.mxu0 %v1400
    %v1440 = vpop.f32.mrf.mxu0
    %v1441 = vadd.f32 %v843, %v1440
    %1442 = vmatmul.f32.gmra.mxu0 %v1403
    %v1443 = vpop.f32.mrf.mxu0
    %v1444 = vadd.f32 %v844, %v1443
    %1445 = vmatmul.f32.gmra.mxu0 %v1406
    %v1446 = vpop.f32.mrf.mxu0
    %v1447 = vadd.f32 %v845, %v1446
    %1448 = vmatmul.f32.gmra.mxu0 %v1409
    %v1449 = vpop.f32.mrf.mxu0
    %v1450 = vadd.f32 %v846, %v1449
    %1451 = vmatmul.f32.gmra.mxu0 %v1412
    %v1452 = vpop.f32.mrf.mxu0
    %v1453 = vadd.f32 %v847, %v1452
    %1454 = vmatmul.f32.gmra.mxu0 %v1415
    %v1455 = vpop.f32.mrf.mxu0
    %v1456 = vadd.f32 %v848, %v1455
    %1457 = vmatmul.f32.gmra.mxu0 %v1418
    %v1458 = vpop.f32.mrf.mxu0
    %v1459 = vadd.f32 %v849, %v1458
    %1460 = vmatmul.f32.gmra.mxu0 %v1421
    %v1461 = vpop.f32.mrf.mxu0
    %v1462 = vadd.f32 %v850, %v1461
    %1463 = vdwg.mxu0
    %1464 = vrot.lane.b32.xlu0 %v901, 96
    %v1465 = vpop.permute.xlu0 %1464
    %1466 = vrot.lane.b32.xlu0 %v904, 96
    %v1467 = vpop.permute.xlu0 %1466
    %1468 = vrot.lane.b32.xlu0 %v907, 96
    %v1469 = vpop.permute.xlu0 %1468
    %1470 = vrot.lane.b32.xlu0 %v910, 96
    %v1471 = vpop.permute.xlu0 %1470
    %1472 = vrot.lane.b32.xlu0 %v913, 96
    %v1473 = vpop.permute.xlu0 %1472
    %1474 = vrot.lane.b32.xlu0 %v916, 96
    %v1475 = vpop.permute.xlu0 %1474
    %1476 = vrot.lane.b32.xlu0 %v919, 96
    %v1477 = vpop.permute.xlu0 %1476
    %1478 = vrot.lane.b32.xlu0 %v922, 96
    %v1479 = vpop.permute.xlu0 %1478
    %1488 = vrot.lane.b32.xlu0 %v843, 96
    %v1489 = vpop.permute.xlu0 %1488
    %1490 = vrot.lane.b32.xlu0 %v844, 96
    %v1491 = vpop.permute.xlu0 %1490
    %1492 = vrot.lane.b32.xlu0 %v845, 96
    %v1493 = vpop.permute.xlu0 %1492
    %1494 = vrot.lane.b32.xlu0 %v846, 96
    %v1495 = vpop.permute.xlu0 %1494
    %1496 = vrot.lane.b32.xlu0 %v847, 96
    %v1497 = vpop.permute.xlu0 %1496
    %1498 = vrot.lane.b32.xlu0 %v848, 96
    %v1499 = vpop.permute.xlu0 %1498
    %1500 = vrot.lane.b32.xlu0 %v849, 96
    %v1501 = vpop.permute.xlu0 %1500
    %1502 = vrot.lane.b32.xlu0 %v850, 96
    %v1503 = vpop.permute.xlu0 %1502
    %v1513 = vsel %vm285, %v1391, 0
    %v1516 = vsel %vm285, %v1392, 0
    %v1519 = vsel %vm285, %v1393, 0
    %v1522 = vsel %vm285, %v1394, 0
    %v1525 = vsel %vm285, %v1395, 0
    %v1528 = vsel %vm285, %v1396, 0
    %v1531 = vsel %vm285, %v1397, 0
    %v1534 = vsel %vm285, %v1398, 0
    %1536 = vmatpush.msra.mxu0 0.0
    %1537 = vmatpush.msra.mxu0 0.0
    %1538 = vmatpush.msra.mxu0 0.0
    %1539 = vmatpush.msra.mxu0 0.0
    %1540 = vmatpush.msra.mxu0 0.0
    %1541 = vmatpush.msra.mxu0 0.0
    %1542 = vmatpush.msra.mxu0 0.0
    %1543 = vmatpush.msra.mxu0 0.0
    %1544 = vmatpush.msra.mxu0 %v1479
    %1545 = vmatpush.msra.mxu0 %v1477
    %1546 = vmatpush.msra.mxu0 %v1475
    %1547 = vmatpush.msra.mxu0 %v1473
    %1548 = vmatpush.msra.mxu0 %v1471
    %1549 = vmatpush.msra.mxu0 %v1469
    %1550 = vmatpush.msra.mxu0 %v1467
    %1551 = vmatpush.msra.mxu0 %v1465
    %1552 = vmatmul.f32.gmra.mxu0 %v1513
    %v1553 = vpop.f32.mrf.mxu0
    %v1554 = vadd.f32 %v1489, %v1553
    %1555 = vmatmul.f32.gmra.mxu0 %v1516
    %v1556 = vpop.f32.mrf.mxu0
    %v1557 = vadd.f32 %v1491, %v1556
    %1558 = vmatmul.f32.gmra.mxu0 %v1519
    %v1559 = vpop.f32.mrf.mxu0
    %v1560 = vadd.f32 %v1493, %v1559
    %1561 = vmatmul.f32.gmra.mxu0 %v1522
    %v1562 = vpop.f32.mrf.mxu0
    %v1563 = vadd.f32 %v1495, %v1562
    %1564 = vmatmul.f32.gmra.mxu0 %v1525
    %v1565 = vpop.f32.mrf.mxu0
    %v1566 = vadd.f32 %v1497, %v1565
    %1567 = vmatmul.f32.gmra.mxu0 %v1528
    %v1568 = vpop.f32.mrf.mxu0
    %v1569 = vadd.f32 %v1499, %v1568
    %1570 = vmatmul.f32.gmra.mxu0 %v1531
    %v1571 = vpop.f32.mrf.mxu0
    %v1572 = vadd.f32 %v1501, %v1571
    %1573 = vmatmul.f32.gmra.mxu0 %v1534
    %v1574 = vpop.f32.mrf.mxu0
    %v1575 = vadd.f32 %v1503, %v1574
    %1576 = vdwg.mxu0
    %1585 = vrot.lane.b32.xlu0 %v1554, 32
    %v1586 = vpop.permute.xlu0 %1585
    %1587 = vrot.lane.b32.xlu0 %v1557, 32
    %v1588 = vpop.permute.xlu0 %1587
    %1589 = vrot.lane.b32.xlu0 %v1560, 32
    %v1590 = vpop.permute.xlu0 %1589
    %1591 = vrot.lane.b32.xlu0 %v1563, 32
    %v1592 = vpop.permute.xlu0 %1591
    %1593 = vrot.lane.b32.xlu0 %v1566, 32
    %v1594 = vpop.permute.xlu0 %1593
    %1595 = vrot.lane.b32.xlu0 %v1569, 32
    %v1596 = vpop.permute.xlu0 %1595
    %1597 = vrot.lane.b32.xlu0 %v1572, 32
    %v1598 = vpop.permute.xlu0 %1597
    %1599 = vrot.lane.b32.xlu0 %v1575, 32
    %v1600 = vpop.permute.xlu0 %1599
    %v1609 = vsel %vm802, %v1441, %v1586
    %v1610 = vsel %vm802, %v1444, %v1588
    %v1611 = vsel %vm802, %v1447, %v1590
    %v1612 = vsel %vm802, %v1450, %v1592
    %v1613 = vsel %vm802, %v1453, %v1594
    %v1614 = vsel %vm802, %v1456, %v1596
    %v1615 = vsel %vm802, %v1459, %v1598
    %v1616 = vsel %vm802, %v1462, %v1600
    %vm1617 = vcmp.gt.f32.partialorder %v1609, 0.0
    %vm1618 = vcmp.gt.f32.partialorder %v1610, 0.0
    %vm1619 = vcmp.gt.f32.partialorder %v1611, 0.0
    %vm1620 = vcmp.gt.f32.partialorder %v1612, 0.0
    %vm1621 = vcmp.gt.f32.partialorder %v1613, 0.0
    %vm1622 = vcmp.gt.f32.partialorder %v1614, 0.0
    %vm1623 = vcmp.gt.f32.partialorder %v1615, 0.0
    %vm1624 = vcmp.gt.f32.partialorder %v1616, 0.0
    %v1625 = vmul.f32 %v1609, 1.442695
    %v1626 = vpow.pop %v1625
    %v1627 = vmul.f32 %v1610, 1.442695
    %v1628 = vpow.pop %v1627
    %v1629 = vmul.f32 %v1611, 1.442695
    %v1630 = vpow.pop %v1629
    %v1631 = vmul.f32 %v1612, 1.442695
    %v1632 = vpow.pop %v1631
    %v1633 = vmul.f32 %v1613, 1.442695
    %v1634 = vpow.pop %v1633
    %v1635 = vmul.f32 %v1614, 1.442695
    %v1636 = vpow.pop %v1635
    %v1637 = vmul.f32 %v1615, 1.442695
    %v1638 = vpow.pop %v1637
    %v1639 = vmul.f32 %v1616, 1.442695
    %v1640 = vpow.pop %v1639
    %v1641 = vsub.f32 %v1626, 1.0
    %v1642 = vsub.f32 %v1628, 1.0
    %v1643 = vsub.f32 %v1630, 1.0
    %v1644 = vsub.f32 %v1632, 1.0
    %v1645 = vsub.f32 %v1634, 1.0
    %v1646 = vsub.f32 %v1636, 1.0
    %v1647 = vsub.f32 %v1638, 1.0
    %v1648 = vsub.f32 %v1640, 1.0
    %v1649 = vsel %vm1617, %v1609, %v1641
    %v1650 = vsel %vm1618, %v1610, %v1642
    %v1651 = vsel %vm1619, %v1611, %v1643
    %v1652 = vsel %vm1620, %v1612, %v1644
    %v1653 = vsel %vm1621, %v1613, %v1645
    %v1654 = vsel %vm1622, %v1614, %v1646
    %v1655 = vsel %vm1623, %v1615, %v1647
    %v1656 = vsel %vm1624, %v1616, %v1648
    %vm1657 = vcmp.gt.f32.partialorder %v1649, 0.0
    %vm1658 = vcmp.gt.f32.partialorder %v1650, 0.0
    %vm1659 = vcmp.gt.f32.partialorder %v1651, 0.0
    %vm1660 = vcmp.gt.f32.partialorder %v1652, 0.0
    %vm1661 = vcmp.gt.f32.partialorder %v1653, 0.0
    %vm1662 = vcmp.gt.f32.partialorder %v1654, 0.0
    %vm1663 = vcmp.gt.f32.partialorder %v1655, 0.0
    %vm1664 = vcmp.gt.f32.partialorder %v1656, 0.0
    %v1665 = vmul.f32 %v1649, 1.442695
    %v1666 = vpow.pop %v1665
    %v1667 = vmul.f32 %v1650, 1.442695
    %v1668 = vpow.pop %v1667
    %v1669 = vmul.f32 %v1651, 1.442695
    %v1670 = vpow.pop %v1669
    %v1671 = vmul.f32 %v1652, 1.442695
    %v1672 = vpow.pop %v1671
    %v1673 = vmul.f32 %v1653, 1.442695
    %v1674 = vpow.pop %v1673
    %v1675 = vmul.f32 %v1654, 1.442695
    %v1676 = vpow.pop %v1675
    %v1677 = vmul.f32 %v1655, 1.442695
    %v1678 = vpow.pop %v1677
    %v1679 = vmul.f32 %v1656, 1.442695
    %v1680 = vpow.pop %v1679
    %v1681 = vsub.f32 %v1666, 1.0
    %v1682 = vsub.f32 %v1668, 1.0
    %v1683 = vsub.f32 %v1670, 1.0
    %v1684 = vsub.f32 %v1672, 1.0
    %v1685 = vsub.f32 %v1674, 1.0
    %v1686 = vsub.f32 %v1676, 1.0
    %v1687 = vsub.f32 %v1678, 1.0
    %v1688 = vsub.f32 %v1680, 1.0
    %v1689 = vsel %vm1657, %v1649, %v1681
    %v1690 = vsel %vm1658, %v1650, %v1682
    %v1691 = vsel %vm1659, %v1651, %v1683
    %v1692 = vsel %vm1660, %v1652, %v1684
    %v1693 = vsel %vm1661, %v1653, %v1685
    %v1694 = vsel %vm1662, %v1654, %v1686
    %v1695 = vsel %vm1663, %v1655, %v1687
    %v1696 = vsel %vm1664, %v1656, %v1688
    %v1697 = vld [vmem:[%s4] sm:$0xff]
    %v1698 = vld [vmem:[%s4 + $0x8] sm:$0xff]
    %v1699 = vld [vmem:[%s4 + $0x10] sm:$0xff]
    %v1700 = vld [vmem:[%s4 + $0x18] sm:$0xff]
    %v1701 = vld [vmem:[%s4 + $0x20] sm:$0xff]
    %v1702 = vld [vmem:[%s4 + $0x28] sm:$0xff]
    %v1703 = vld [vmem:[%s4 + $0x30] sm:$0xff]
    %v1704 = vld [vmem:[%s4 + $0x38] sm:$0xff]
    %v1706 = vsel %vm285, %v1689, 0
    %v1709 = vsel %vm285, %v1690, 0
    %v1712 = vsel %vm285, %v1691, 0
    %v1715 = vsel %vm285, %v1692, 0
    %v1718 = vsel %vm285, %v1693, 0
    %v1721 = vsel %vm285, %v1694, 0
    %v1724 = vsel %vm285, %v1695, 0
    %v1727 = vsel %vm285, %v1696, 0
    %1729 = vmatpush.msra.mxu0 0.0
    %1730 = vmatpush.msra.mxu0 0.0
    %1731 = vmatpush.msra.mxu0 0.0
    %1732 = vmatpush.msra.mxu0 0.0
    %1733 = vmatpush.msra.mxu0 0.0
    %1734 = vmatpush.msra.mxu0 0.0
    %1735 = vmatpush.msra.mxu0 0.0
    %1736 = vmatpush.msra.mxu0 0.0
    %1737 = vmatpush.msra.mxu0 %v1704
    %1738 = vmatpush.msra.mxu0 %v1703
    %1739 = vmatpush.msra.mxu0 %v1702
    %1740 = vmatpush.msra.mxu0 %v1701
    %1741 = vmatpush.msra.mxu0 %v1700
    %1742 = vmatpush.msra.mxu0 %v1699
    %1743 = vmatpush.msra.mxu0 %v1698
    %1744 = vmatpush.msra.mxu0 %v1697
    %1745 = vmatmul.f32.gmra.mxu0 %v1706
    %v1746 = vpop.f32.mrf.mxu0
    %v1747 = vadd.f32 0.0, %v1746
    %1748 = vmatmul.f32.gmra.mxu0 %v1709
    %v1749 = vpop.f32.mrf.mxu0
    %v1750 = vadd.f32 0.0, %v1749
    %1751 = vmatmul.f32.gmra.mxu0 %v1712
    %v1752 = vpop.f32.mrf.mxu0
    %v1753 = vadd.f32 0.0, %v1752
    %1754 = vmatmul.f32.gmra.mxu0 %v1715
    %v1755 = vpop.f32.mrf.mxu0
    %v1756 = vadd.f32 0.0, %v1755
    %1757 = vmatmul.f32.gmra.mxu0 %v1718
    %v1758 = vpop.f32.mrf.mxu0
    %v1759 = vadd.f32 0.0, %v1758
    %1760 = vmatmul.f32.gmra.mxu0 %v1721
    %v1761 = vpop.f32.mrf.mxu0
    %v1762 = vadd.f32 0.0, %v1761
    %1763 = vmatmul.f32.gmra.mxu0 %v1724
    %v1764 = vpop.f32.mrf.mxu0
    %v1765 = vadd.f32 0.0, %v1764
    %1766 = vmatmul.f32.gmra.mxu0 %v1727
    %v1767 = vpop.f32.mrf.mxu0
    %v1768 = vadd.f32 0.0, %v1767
    %1769 = vdwg.mxu0
    %1778 = vrot.lane.b32.xlu0 %v1747, 120
    %v1779 = vpop.permute.xlu0 %1778
    %1780 = vrot.lane.b32.xlu0 %v1750, 120
    %v1781 = vpop.permute.xlu0 %1780
    %1782 = vrot.lane.b32.xlu0 %v1753, 120
    %v1783 = vpop.permute.xlu0 %1782
    %1784 = vrot.lane.b32.xlu0 %v1756, 120
    %v1785 = vpop.permute.xlu0 %1784
    %1786 = vrot.lane.b32.xlu0 %v1759, 120
    %v1787 = vpop.permute.xlu0 %1786
    %1788 = vrot.lane.b32.xlu0 %v1762, 120
    %v1789 = vpop.permute.xlu0 %1788
    %1790 = vrot.lane.b32.xlu0 %v1765, 120
    %v1791 = vpop.permute.xlu0 %1790
    %1792 = vrot.lane.b32.xlu0 %v1768, 120
    %v1793 = vpop.permute.xlu0 %1792
    %vm1802 = vcmask 7168
    %v1803 = vsel %vm1802, %v1779, 0.0
    %v1804 = vsel %vm1802, %v1781, 0.0
    %v1805 = vsel %vm1802, %v1783, 0.0
    %v1806 = vsel %vm1802, %v1785, 0.0
    %v1807 = vsel %vm1802, %v1787, 0.0
    %v1808 = vsel %vm1802, %v1789, 0.0
    %v1809 = vsel %vm1802, %v1791, 0.0
    %v1810 = vsel %vm1802, %v1793, 0.0
    %1811 = vxpose.xlu0.b32.start [1/16] %v1803, 128
    %1812 = vxpose.xlu0.b32.cont [2/16] %v1804, 128
    %1813 = vxpose.xlu0.b32.cont [3/16] %v1805, 128
    %1814 = vxpose.xlu0.b32.cont [4/16] %v1806, 128
    %1815 = vxpose.xlu0.b32.cont [5/16] %v1807, 128
    %1816 = vxpose.xlu0.b32.cont [6/16] %v1808, 128
    %1817 = vxpose.xlu0.b32.cont [7/16] %v1809, 128
    %1818 = vxpose.xlu0.b32.cont [8/16] %v1810, 128
    %1819 = vxpose.xlu0.b32.cont [9/16] 0.0, 128
    %1820 = vxpose.xlu0.b32.cont [10/16] 0.0, 128
    %1821 = vxpose.xlu0.b32.cont [11/16] 0.0, 128
    %1822 = vxpose.xlu0.b32.cont [12/16] 0.0, 128
    %1823 = vxpose.xlu0.b32.cont [13/16] 0.0, 128
    %1824 = vxpose.xlu0.b32.cont [14/16] 0.0, 128
    %1825 = vxpose.xlu0.b32.cont [15/16] 0.0, 128
    %1826 = vxpose.xlu0.b32.end [16/16] 0.0, 128
    %v1827 = vpop.trf.xlu0
    %v1828 = vpop.trf.xlu0
    %v1829 = vpop.trf.xlu0
    %v1830 = vpop.trf.xlu0
    %v1831 = vpop.trf.xlu0
    %v1832 = vpop.trf.xlu0
    %v1833 = vpop.trf.xlu0
    %v1834 = vpop.trf.xlu0
    %v1835 = vpop.trf.xlu0
    %v1836 = vpop.trf.xlu0
    %v1837 = vpop.trf.xlu0
    %v1838 = vpop.trf.xlu0
    %v1839 = vpop.trf.xlu0
    %v1840 = vpop.trf.xlu0
    %v1841 = vpop.trf.xlu0
    %v1842 = vpop.trf.xlu0
    %1843 = vset.pattern.permute.xlu0 9
    %1844 = vperm.xlu0 %1843, %v1747
    %v1845 = vpop.permute.xlu0 %1844
    %1847 = vset.pattern.permute.xlu0 9
    %1848 = vperm.xlu0 %1847, %v1750
    %v1849 = vpop.permute.xlu0 %1848
    %1851 = vset.pattern.permute.xlu0 9
    %1852 = vperm.xlu0 %1851, %v1753
    %v1853 = vpop.permute.xlu0 %1852
    %1855 = vset.pattern.permute.xlu0 9
    %1856 = vperm.xlu0 %1855, %v1756
    %v1857 = vpop.permute.xlu0 %1856
    %1859 = vset.pattern.permute.xlu0 9
    %1860 = vperm.xlu0 %1859, %v1759
    %v1861 = vpop.permute.xlu0 %1860
    %1863 = vset.pattern.permute.xlu0 9
    %1864 = vperm.xlu0 %1863, %v1762
    %v1865 = vpop.permute.xlu0 %1864
    %1867 = vset.pattern.permute.xlu0 9
    %1868 = vperm.xlu0 %1867, %v1765
    %v1869 = vpop.permute.xlu0 %1868
    %1871 = vset.pattern.permute.xlu0 9
    %1872 = vperm.xlu0 %1871, %v1768
    %v1873 = vpop.permute.xlu0 %1872
    %v1875 = vperm.slane %v1827, 0
    %v1876 = vadd.f32 %v1845, %v1875
    %v1877 = vadd.f32 %v1849, %v1875
    %v1878 = vadd.f32 %v1853, %v1875
    %v1879 = vadd.f32 %v1857, %v1875
    %v1880 = vadd.f32 %v1861, %v1875
    %v1881 = vadd.f32 %v1865, %v1875
    %v1882 = vadd.f32 %v1869, %v1875
    %v1883 = vadd.f32 %v1873, %v1875
    %vm1884 = vcmp.ge.f32.partialorder %v1876, 0.0
    %vm1885 = vcmp.ge.f32.partialorder %v1877, 0.0
    %vm1886 = vcmp.ge.f32.partialorder %v1878, 0.0
    %vm1887 = vcmp.ge.f32.partialorder %v1879, 0.0
    %vm1888 = vcmp.ge.f32.partialorder %v1880, 0.0
    %vm1889 = vcmp.ge.f32.partialorder %v1881, 0.0
    %vm1890 = vcmp.ge.f32.partialorder %v1882, 0.0
    %vm1891 = vcmp.ge.f32.partialorder %v1883, 0.0
    %v1892 = vmul.f32 %v1876, 0.2
    %v1893 = vmul.f32 %v1877, 0.2
    %v1894 = vmul.f32 %v1878, 0.2
    %v1895 = vmul.f32 %v1879, 0.2
    %v1896 = vmul.f32 %v1880, 0.2
    %v1897 = vmul.f32 %v1881, 0.2
    %v1898 = vmul.f32 %v1882, 0.2
    %v1899 = vmul.f32 %v1883, 0.2
    %v1900 = vsel %vm1884, %v1876, %v1892
    %v1901 = vsel %vm1885, %v1877, %v1893
    %v1902 = vsel %vm1886, %v1878, %v1894
    %v1903 = vsel %vm1887, %v1879, %v1895
    %v1904 = vsel %vm1888, %v1880, %v1896
    %v1905 = vsel %vm1889, %v1881, %v1897
    %v1906 = vsel %vm1890, %v1882, %v1898
    %v1907 = vsel %vm1891, %v1883, %v1899
    %v1908 = vmul.f32 %v1900, %v35
    %v1909 = vmul.f32 %v1901, %v36
    %v1910 = vmul.f32 %v1902, %v37
    %v1911 = vmul.f32 %v1903, %v38
    %v1912 = vmul.f32 %v1904, %v39
    %v1913 = vmul.f32 %v1905, %v40
    %v1914 = vmul.f32 %v1906, %v41
    %v1915 = vmul.f32 %v1907, %v42
    %1916 = vst.msk [vmem:[#allocation7] sm:$0xff] %vm285, %v1908
    %1917 = vst.msk [vmem:[#allocation7 + $0x8] sm:$0xff] %vm285, %v1909
    %1918 = vst.msk [vmem:[#allocation7 + $0x10] sm:$0xff] %vm285, %v1910
    %1919 = vst.msk [vmem:[#allocation7 + $0x18] sm:$0xff] %vm285, %v1911
    %1920 = vst.msk [vmem:[#allocation7 + $0x20] sm:$0xff] %vm285, %v1912
    %1921 = vst.msk [vmem:[#allocation7 + $0x28] sm:$0xff] %vm285, %v1913
    %1922 = vst.msk [vmem:[#allocation7 + $0x30] sm:$0xff] %vm285, %v1914
    %1923 = vst.msk [vmem:[#allocation7 + $0x38] sm:$0xff] %vm285, %v1915
    %v1924 = vadd.f32 %v1900, %v51
    %v1925 = vadd.f32 %v1901, %v52
    %v1926 = vadd.f32 %v1902, %v53
    %v1927 = vadd.f32 %v1903, %v54
    %v1928 = vadd.f32 %v1904, %v55
    %v1929 = vadd.f32 %v1905, %v56
    %v1930 = vadd.f32 %v1906, %v57
    %v1931 = vadd.f32 %v1907, %v58
    %v1932 = vsel %vm285, %v1924, -inf
    %1933 = vmax.xlane.f32.xlu0 %v1932
    %v1934 = vpop.xlane.xlu0 %1933
    %v1935 = vsel %vm285, %v1925, -inf
    %1936 = vmax.xlane.f32.xlu0 %v1935
    %v1937 = vpop.xlane.xlu0 %1936
    %v1938 = vsel %vm285, %v1926, -inf
    %1939 = vmax.xlane.f32.xlu0 %v1938
    %v1940 = vpop.xlane.xlu0 %1939
    %v1941 = vsel %vm285, %v1927, -inf
    %1942 = vmax.xlane.f32.xlu0 %v1941
    %v1943 = vpop.xlane.xlu0 %1942
    %v1944 = vsel %vm285, %v1928, -inf
    %1945 = vmax.xlane.f32.xlu0 %v1944
    %v1946 = vpop.xlane.xlu0 %1945
    %v1947 = vsel %vm285, %v1929, -inf
    %1948 = vmax.xlane.f32.xlu0 %v1947
    %v1949 = vpop.xlane.xlu0 %1948
    %v1950 = vsel %vm285, %v1930, -inf
    %1951 = vmax.xlane.f32.xlu0 %v1950
    %v1952 = vpop.xlane.xlu0 %1951
    %v1953 = vsel %vm285, %v1931, -inf
    %1954 = vmax.xlane.f32.xlu0 %v1953
    %v1955 = vpop.xlane.xlu0 %1954
    %v1956 = vsub.f32 %v1924, %v1934
    %v1957 = vsub.f32 %v1925, %v1937
    %v1958 = vsub.f32 %v1926, %v1940
    %v1959 = vsub.f32 %v1927, %v1943
    %v1960 = vsub.f32 %v1928, %v1946
    %v1961 = vsub.f32 %v1929, %v1949
    %v1962 = vsub.f32 %v1930, %v1952
    %v1963 = vsub.f32 %v1931, %v1955
    %v1964 = vmul.f32 %v1956, 1.442695
    %v1965 = vpow.pop %v1964
    %v1966 = vmul.f32 %v1957, 1.442695
    %v1967 = vpow.pop %v1966
    %v1968 = vmul.f32 %v1958, 1.442695
    %v1969 = vpow.pop %v1968
    %v1970 = vmul.f32 %v1959, 1.442695
    %v1971 = vpow.pop %v1970
    %v1972 = vmul.f32 %v1960, 1.442695
    %v1973 = vpow.pop %v1972
    %v1974 = vmul.f32 %v1961, 1.442695
    %v1975 = vpow.pop %v1974
    %v1976 = vmul.f32 %v1962, 1.442695
    %v1977 = vpow.pop %v1976
    %v1978 = vmul.f32 %v1963, 1.442695
    %v1979 = vpow.pop %v1978
    %v1980 = vsel %vm285, %v1965, 0.0
    %1981 = vadd.xlane.f32.xlu0 %v1980
    %v1982 = vpop.xlane.xlu0 %1981
    %v1983 = vsel %vm285, %v1967, 0.0
    %1984 = vadd.xlane.f32.xlu0 %v1983
    %v1985 = vpop.xlane.xlu0 %1984
    %v1986 = vsel %vm285, %v1969, 0.0
    %1987 = vadd.xlane.f32.xlu0 %v1986
    %v1988 = vpop.xlane.xlu0 %1987
    %v1989 = vsel %vm285, %v1971, 0.0
    %1990 = vadd.xlane.f32.xlu0 %v1989
    %v1991 = vpop.xlane.xlu0 %1990
    %v1992 = vsel %vm285, %v1973, 0.0
    %1993 = vadd.xlane.f32.xlu0 %v1992
    %v1994 = vpop.xlane.xlu0 %1993
    %v1995 = vsel %vm285, %v1975, 0.0
    %1996 = vadd.xlane.f32.xlu0 %v1995
    %v1997 = vpop.xlane.xlu0 %1996
    %v1998 = vsel %vm285, %v1977, 0.0
    %1999 = vadd.xlane.f32.xlu0 %v1998
    %v2000 = vpop.xlane.xlu0 %1999
    %v2001 = vsel %vm285, %v1979, 0.0
    %2002 = vadd.xlane.f32.xlu0 %v2001
    %v2003 = vpop.xlane.xlu0 %2002
    %v2004 = vrcp.pop %v1982
    %v2005 = vrcp.pop %v1985
    %v2006 = vrcp.pop %v1988
    %v2007 = vrcp.pop %v1991
    %v2008 = vrcp.pop %v1994
    %v2009 = vrcp.pop %v1997
    %v2010 = vrcp.pop %v2000
    %v2011 = vrcp.pop %v2003
    %v2012 = vmul.f32 %v1982, %v2004
    %v2013 = vmul.f32 %v1985, %v2005
    %v2014 = vmul.f32 %v1988, %v2006
    %v2015 = vmul.f32 %v1991, %v2007
    %v2016 = vmul.f32 %v1994, %v2008
    %v2017 = vmul.f32 %v1997, %v2009
    %v2018 = vmul.f32 %v2000, %v2010
    %v2019 = vmul.f32 %v2003, %v2011
    %v2020 = vsub.f32 2.0, %v2012
    %v2021 = vsub.f32 2.0, %v2013
    %v2022 = vsub.f32 2.0, %v2014
    %v2023 = vsub.f32 2.0, %v2015
    %v2024 = vsub.f32 2.0, %v2016
    %v2025 = vsub.f32 2.0, %v2017
    %v2026 = vsub.f32 2.0, %v2018
    %v2027 = vsub.f32 2.0, %v2019
    %v2028 = vmul.f32 %v2004, %v2020
    %v2029 = vmul.f32 %v2005, %v2021
    %v2030 = vmul.f32 %v2006, %v2022
    %v2031 = vmul.f32 %v2007, %v2023
    %v2032 = vmul.f32 %v2008, %v2024
    %v2033 = vmul.f32 %v2009, %v2025
    %v2034 = vmul.f32 %v2010, %v2026
    %v2035 = vmul.f32 %v2011, %v2027
    %v2036 = vmul.f32 %v1965, %v2028
    %v2037 = vmul.f32 %v1967, %v2029
    %v2038 = vmul.f32 %v1969, %v2030
    %v2039 = vmul.f32 %v1971, %v2031
    %v2040 = vmul.f32 %v1973, %v2032
    %v2041 = vmul.f32 %v1975, %v2033
    %v2042 = vmul.f32 %v1977, %v2034
    %v2043 = vmul.f32 %v1979, %v2035
    %2044 = vrot.lane.b32.xlu0 %v1747, 124
    %v2045 = vpop.permute.xlu0 %2044
    %2046 = vrot.lane.b32.xlu0 %v1750, 124
    %v2047 = vpop.permute.xlu0 %2046
    %2048 = vrot.lane.b32.xlu0 %v1753, 124
    %v2049 = vpop.permute.xlu0 %2048
    %2050 = vrot.lane.b32.xlu0 %v1756, 124
    %v2051 = vpop.permute.xlu0 %2050
    %2052 = vrot.lane.b32.xlu0 %v1759, 124
    %v2053 = vpop.permute.xlu0 %2052
    %2054 = vrot.lane.b32.xlu0 %v1762, 124
    %v2055 = vpop.permute.xlu0 %2054
    %2056 = vrot.lane.b32.xlu0 %v1765, 124
    %v2057 = vpop.permute.xlu0 %2056
    %2058 = vrot.lane.b32.xlu0 %v1768, 124
    %v2059 = vpop.permute.xlu0 %2058
    %v2069 = vsel %vm285, %v2036, 0
    %v2072 = vsel %vm285, %v2037, 0
    %v2075 = vsel %vm285, %v2038, 0
    %v2078 = vsel %vm285, %v2039, 0
    %v2081 = vsel %vm285, %v2040, 0
    %v2084 = vsel %vm285, %v2041, 0
    %v2087 = vsel %vm285, %v2042, 0
    %v2090 = vsel %vm285, %v2043, 0
    %2092 = vmatpush.msra.mxu0 0.0
    %2093 = vmatpush.msra.mxu0 0.0
    %2094 = vmatpush.msra.mxu0 0.0
    %2095 = vmatpush.msra.mxu0 0.0
    %2096 = vmatpush.msra.mxu0 0.0
    %2097 = vmatpush.msra.mxu0 0.0
    %2098 = vmatpush.msra.mxu0 0.0
    %2099 = vmatpush.msra.mxu0 0.0
    %2100 = vmatpush.msra.mxu0 %v1768
    %2101 = vmatpush.msra.mxu0 %v1765
    %2102 = vmatpush.msra.mxu0 %v1762
    %2103 = vmatpush.msra.mxu0 %v1759
    %2104 = vmatpush.msra.mxu0 %v1756
    %2105 = vmatpush.msra.mxu0 %v1753
    %2106 = vmatpush.msra.mxu0 %v1750
    %2107 = vmatpush.msra.mxu0 %v1747
    %2108 = vmatmul.f32.gmra.mxu0 %v2069
    %v2109 = vpop.f32.mrf.mxu0
    %v2110 = vadd.f32 %v2045, %v2109
    %2111 = vmatmul.f32.gmra.mxu0 %v2072
    %v2112 = vpop.f32.mrf.mxu0
    %v2113 = vadd.f32 %v2047, %v2112
    %2114 = vmatmul.f32.gmra.mxu0 %v2075
    %v2115 = vpop.f32.mrf.mxu0
    %v2116 = vadd.f32 %v2049, %v2115
    %2117 = vmatmul.f32.gmra.mxu0 %v2078
    %v2118 = vpop.f32.mrf.mxu0
    %v2119 = vadd.f32 %v2051, %v2118
    %2120 = vmatmul.f32.gmra.mxu0 %v2081
    %v2121 = vpop.f32.mrf.mxu0
    %v2122 = vadd.f32 %v2053, %v2121
    %2123 = vmatmul.f32.gmra.mxu0 %v2084
    %v2124 = vpop.f32.mrf.mxu0
    %v2125 = vadd.f32 %v2055, %v2124
    %2126 = vmatmul.f32.gmra.mxu0 %v2087
    %v2127 = vpop.f32.mrf.mxu0
    %v2128 = vadd.f32 %v2057, %v2127
    %2129 = vmatmul.f32.gmra.mxu0 %v2090
    %v2130 = vpop.f32.mrf.mxu0
    %v2131 = vadd.f32 %v2059, %v2130
    %2132 = vdwg.mxu0
    %vm2133 = vcmask 31744
    %v2134 = vsel %vm2133, %v2110, 0.0
    %v2135 = vsel %vm2133, %v2113, 0.0
    %v2136 = vsel %vm2133, %v2116, 0.0
    %v2137 = vsel %vm2133, %v2119, 0.0
    %v2138 = vsel %vm2133, %v2122, 0.0
    %v2139 = vsel %vm2133, %v2125, 0.0
    %v2140 = vsel %vm2133, %v2128, 0.0
    %v2141 = vsel %vm2133, %v2131, 0.0
    %2142 = vst [vmem:[#allocation2] sm:$0xff] %v2134
    %2143 = vst [vmem:[#allocation2 + $0x8] sm:$0xff] %v2135
    %2144 = vst [vmem:[#allocation2 + $0x10] sm:$0xff] %v2136
    %2145 = vst [vmem:[#allocation2 + $0x18] sm:$0xff] %v2137
    %2146 = vst [vmem:[#allocation2 + $0x20] sm:$0xff] %v2138
    %2147 = vst [vmem:[#allocation2 + $0x28] sm:$0xff] %v2139
    %2148 = vst [vmem:[#allocation2 + $0x30] sm:$0xff] %v2140
    %2149 = vst [vmem:[#allocation2 + $0x38] sm:$0xff] %v2141
    // Predicated region
    $region22: #{tpu_custom_call.1} parent=1 // pred_check
      _
    $region23: #{tpu_custom_call.1} parent=1 // pred_check_branch
      %2151 = sbr.rel (0) target = $region25
    $region24: #{tpu_custom_call.1} parent=1 // pred_region
      %2153 = vsyncadd [#allocation3], 0
      %s2154 = sshll.u32 [#allocation2], 4
      %s2155 = int_to_ptr.vmem [resolvable:$true] %s2154
      %s2156 = sshll.u32 %s5, 4
      %s2157 = int_to_ptr.hbm [resolvable:$true] %s2156
      %2162 = dma.vmem_to_hbm [thread:$0]  %s2155, 1024, %s2157, [#allocation3], 128, 128, 8
    $region25: #{tpu_custom_call.1} parent=1 // pred_fallthru
      _
    // Predicated region
    $region26: #{tpu_custom_call.1} parent=1 // pred_check
      _
    $region27: #{tpu_custom_call.1} parent=1 // pred_check_branch
      %2164 = sbr.rel (0) target = $region29
    $region28: #{tpu_custom_call.1} parent=1 // pred_region
      %2166 = vsyncadd [#allocation5], 0
      %s2167 = sshll.u32 [#allocation4], 4
      %s2168 = int_to_ptr.vmem [resolvable:$true] %s2167
      %s2169 = sshll.u32 %s6, 4
      %s2170 = int_to_ptr.hbm [resolvable:$true] %s2169
      %2175 = dma.vmem_to_hbm [thread:$0]  %s2168, 2048, %s2170, [#allocation5], 128, 128, 8
    $region29: #{tpu_custom_call.1} parent=1 // pred_fallthru
      _
    // Predicated region
    $region30: #{tpu_custom_call.1} parent=1 // pred_check
      _
    $region31: #{tpu_custom_call.1} parent=1 // pred_check_branch
      %2177 = sbr.rel (0) target = $region33
    $region32: #{tpu_custom_call.1} parent=1 // pred_region
      %2179 = vsyncadd [#allocation5], 0
      %s2180 = sshll.u32 [#allocation6], 4
      %s2181 = int_to_ptr.vmem [resolvable:$true] %s2180
      %s2182 = sshll.u32 %s7, 4
      %s2183 = int_to_ptr.hbm [resolvable:$true] %s2182
      %2188 = dma.vmem_to_hbm [thread:$0]  %s2181, 2048, %s2183, [#allocation5], 128, 128, 8
    $region33: #{tpu_custom_call.1} parent=1 // pred_fallthru
      _
    // Predicated region
    $region34: #{tpu_custom_call.1} parent=1 // pred_check
      _
    $region35: #{tpu_custom_call.1} parent=1 // pred_check_branch
      %2190 = sbr.rel (0) target = $region37
    $region36: #{tpu_custom_call.1} parent=1 // pred_region
      %2192 = vsyncadd [#allocation8], 0
      %s2193 = sshll.u32 [#allocation7], 4
      %s2194 = int_to_ptr.vmem [resolvable:$true] %s2193
      %s2195 = sshll.u32 %s8, 4
      %s2196 = int_to_ptr.hbm [resolvable:$true] %s2195
      %2201 = dma.vmem_to_hbm [thread:$0]  %s2194, 1024, %s2196, [#allocation8], 128, 128, 8
    $region37: #{tpu_custom_call.1} parent=1 // pred_fallthru
      _
    // Predicated region
    $region38: #{tpu_custom_call.1} parent=1 // pred_check
      _
    $region39: #{tpu_custom_call.1} parent=1 // pred_check_branch
      %2203 = sbr.rel (0) target = $region41
    $region40: #{tpu_custom_call.1} parent=1 // pred_region
      %2205 = dma.done [#allocation3], 1024
    $region41: #{tpu_custom_call.1} parent=1 // pred_fallthru
      _
    // Predicated region
    $region42: #{tpu_custom_call.1} parent=1 // pred_check
      _
    $region43: #{tpu_custom_call.1} parent=1 // pred_check_branch
      %2207 = sbr.rel (0) target = $region45
    $region44: #{tpu_custom_call.1} parent=1 // pred_region
      %2209 = dma.done [#allocation5], 2048
    $region45: #{tpu_custom_call.1} parent=1 // pred_fallthru
      _
    // Predicated region
    $region46: #{tpu_custom_call.1} parent=1 // pred_check
      _
    $region47: #{tpu_custom_call.1} parent=1 // pred_check_branch
      %2211 = sbr.rel (0) target = $region49
    $region48: #{tpu_custom_call.1} parent=1 // pred_region
      %2213 = dma.done [#allocation5], 2048
    $region49: #{tpu_custom_call.1} parent=1 // pred_fallthru
      _
    // Predicated region
    $region50: #{tpu_custom_call.1} parent=1 // pred_check
      _
    $region51: #{tpu_custom_call.1} parent=1 // pred_check_branch
      %2215 = sbr.rel (0) target = $region53
    $region52: #{tpu_custom_call.1} parent=1 // pred_region
      %2217 = dma.done [#allocation8], 1024
    $region53: #{tpu_custom_call.1} parent=1 // pred_fallthru
      _
    %2218 = vsyncpa [#allocation3], 1
    %2219 = vsyncpa [#allocation5], 1
    %2220 = vsyncpa [#allocation8], 1

</llo_original>
